<compile_context>
chip_gen: v6e
topology: v6e:2x2x1
jax: 0.10.0
libtpu: 0.0.40
codegen_flags: <defaults>
</compile_context>

<pallas_src>
import functools

import jax
import jax.numpy as jnp
from jax import lax
from jax.experimental import pallas as pl
from jax.experimental.pallas import tpu as pltpu


# --------------------------------- kernel ----------------------------------

def gnn_kernel(num_depots,
               x_ref,
               w_emb, b_emb,
               w_cd1, b_cd1, w_cd2, b_cd2,
               w_fp1, b_fp1, w_fp2, b_fp2,
               w_h1u_cd, w_h1u_ff, b_h1u,
               w_h1r_cd, w_h1r_ff, b_h1r,
               w_u2, b_u2, w_u3, b_u3,
               w_out_u, w_out_r, b_out,
               out_ref):
    def mm(a, w_ref):
        # bf16 MXU inputs, f32 accumulation.
        return jnp.dot(a, w_ref[...], preferred_element_type=jnp.float32)

    def relu_bf16(y):
        # bias-add / ReLU in f32, single cast to bf16 for the next MXU pass.
        return jnp.maximum(y, 0.0).astype(jnp.bfloat16)

    x = x_ref[...].astype(jnp.bfloat16)

    # order_embedding: Linear (+ folded eval-BatchNorm) -> ReLU
    emb = relu_bf16(mm(x, w_emb) + b_emb[...])

    # cross_depot_encoder: Linear -> ReLU -> Linear -> ReLU
    cd = relu_bf16(mm(emb, w_cd1) + b_cd1[...])
    cd = relu_bf16(mm(cd, w_cd2) + b_cd2[...])

    # future_planning_head: Linear -> ReLU -> Linear -> ReLU
    ff = relu_bf16(mm(cd, w_fp1) + b_fp1[...])
    ff = relu_bf16(mm(ff, w_fp2) + b_fp2[...])

    # Fused head first layers.  The single-key attention (W_v @ W_o) and the
    # mean depot embedding are folded into these weights/biases host-side, so
    # h1 = ReLU([att|ff|depot] @ W1 + b1) == ReLU(cd @ Wcd + ff @ Wff + b).
    h1u = relu_bf16(mm(cd, w_h1u_cd) + mm(ff, w_h1u_ff) + b_h1u[...])  # (B,256)
    h1r = relu_bf16(mm(cd, w_h1r_cd) + mm(ff, w_h1r_ff) + b_h1r[...])  # (B,192)

    # unified_scorer middle layers.
    u = relu_bf16(mm(h1u, w_u2) + b_u2[...])   # (B, 128)
    u = relu_bf16(mm(u, w_u3) + b_u3[...])     # (B, 64)

    # Lane-dense fused final projection (padded to 128 output columns):
    # col 0 unified/temp, col 1 cross-depot, col 2 value, col 3 assignment,
    # cols 4..4+nd depot logits, rest zero padding.
    z = mm(u, w_out_u) + mm(h1r, w_out_r) + b_out[...]   # (B, 128) f32

    cols = lax.broadcasted_iota(jnp.int32, z.shape, dimension=1)
    sig_mask = (cols == 0) | (cols == 1) | (cols == 3)
    tanh_mask = cols == 2
    dep_mask = (cols >= 4) & (cols < 4 + num_depots)

    # depot softmax over the masked lanes only.
    logits = jnp.where(dep_mask, z, jnp.float32(-1e30))
    m = jnp.max(logits, axis=-1, keepdims=True)
    e = jnp.where(dep_mask, jnp.exp(logits - m), 0.0)
    prefs = e / jnp.sum(e, axis=-1, keepdims=True)

    out = jnp.where(sig_mask, jax.nn.sigmoid(z),
                    jnp.where(tanh_mask, jnp.tanh(z), prefs))
    out_ref[...] = out.astype(out_ref.dtype)


# ------------------------- host-side constant folding ------------------------

FUSED_WEIGHT_NAMES = [
    "w_emb", "b_emb",
    "w_cd1", "b_cd1", "w_cd2", "b_cd2",
    "w_fp1", "b_fp1", "w_fp2", "b_fp2",
    "w_h1u_cd", "w_h1u_ff", "b_h1u",
    "w_h1r_cd", "w_h1r_ff", "b_h1r",
    "w_u2", "b_u2", "w_u3", "b_u3",
    "w_out_u", "w_out_r", "b_out",
]

MATMUL_WEIGHT_NAMES = [
    "w_emb", "w_cd1", "w_cd2", "w_fp1", "w_fp2",
    "w_h1u_cd", "w_h1u_ff", "w_h1r_cd", "w_h1r_ff",
    "w_u2", "w_u3", "w_out_u", "w_out_r",
]


def fuse_params(p, *, num_depots, out_pad, eps=1e-5):
    """Fold eval-mode constants and fuse head weights (exact in f32)."""
    # eval BatchNorm folded into the embedding Linear.
    scale = p["bn_g"] * jax.lax.rsqrt(p["bn_var"] + eps)            # (1, H)
    w_emb = p["w_emb"] * scale
    b_emb = (p["b_emb"] - p["bn_mu"]) * scale + p["bn_b"]

    # Single-key attention: out_proj(v_proj(.)) -> one linear map.
    w_att = p["w_v"] @ p["w_o"]                                      # (hh, hh)
    b_att = p["b_v"] @ p["w_o"] + p["b_o"]                           # (1, hh)

    hh = p["w_cd2"].shape[0]
    comb = p["w_c1"].shape[0]                                        # hh + 32
    dm = p["depot_mean"]                                             # (1, 64)

    # depot_mean contribution folded into unified / assignment biases.
    b_u1 = p["b_u1"] + dm @ p["w_u1"][comb:, :]
    b_a1 = p["b_a1"] + dm @ p["w_a1"][comb:, :]

    # Fused first layers of all heads along the output dim (input = comb).
    w_h1 = jnp.concatenate([p["w_u1"][:comb], p["w_a1"][:comb],
                            p["w_c1"], p["w_d1"], p["w_ve1"]], axis=1)  # (comb,448)
    b_h1 = jnp.concatenate([b_u1, b_a1, p["b_c1"], p["b_d1"], p["b_ve1"]],
                           axis=1)                                   # (1, 448)

    # Fold the (linear, no-nonlinearity) attention into the att-rows of w_h1.
    w_h1_att = w_h1[:hh, :]                                          # (hh, 448)
    w_h1_ff = w_h1[hh:, :]                                           # (32, 448)
    w_h1_cd = w_att @ w_h1_att                                       # (hh, 448)
    b_h1 = b_h1 + b_att @ w_h1_att

    nu = p["w_u1"].shape[1]                                          # 256
    w_h1u_cd, w_h1r_cd = w_h1_cd[:, :nu], w_h1_cd[:, nu:]
    w_h1u_ff, w_h1r_ff = w_h1_ff[:, :nu], w_h1_ff[:, nu:]
    b_h1u, b_h1r = b_h1[:, :nu], b_h1[:, nu:]
    # h1r column layout: [a1 0:64 | c1 64:96 | d1 96:160 | ve1 160:192]

    # Lane-dense (padded to out_pad cols) final projection, split by input.
    inv_t = 1.0 / p["temp"][0, 0]
    nd = num_depots
    na = p["w_a2"].shape[0]
    nc = p["w_c2"].shape[0]
    ndp = p["w_d2"].shape[0]

    w_out_u = jnp.zeros((p["w_u4"].shape[0], out_pad), jnp.float32)
    w_out_u = w_out_u.at[:, 0:1].set(p["w_u4"] * inv_t)              # unified

    w_out_r = jnp.zeros((w_h1r_cd.shape[1], out_pad), jnp.float32)
    w_out_r = w_out_r.at[0:na, 3:4].set(p["w_a2"])                   # assignment
    w_out_r = w_out_r.at[na:na + nc, 1:2].set(p["w_c2"])             # cross-depot
    w_out_r = w_out_r.at[na + nc:na + nc + ndp, 4:4 + nd].set(p["w_d2"])
    w_out_r = w_out_r.at[na + nc + ndp:, 2:3].set(p["w_ve2"])        # value

    b_out = jnp.zeros((1, out_pad), jnp.float32)
    b_out = b_out.at[:, 0:1].set(p["b_u4"] * inv_t)
    b_out = b_out.at[:, 1:2].set(p["b_c2"])
    b_out = b_out.at[:, 2:3].set(p["b_ve2"])
    b_out = b_out.at[:, 3:4].set(p["b_a2"])
    b_out = b_out.at[:, 4:4 + nd].set(p["b_d2"])

    def w(a):  # MXU inputs in bf16
        return a.astype(jnp.bfloat16)

    def b(a):  # biases / epilogue math stay f32
        return a.astype(jnp.float32)

    return {
        "w_emb": w(w_emb), "b_emb": b(b_emb),
        "w_cd1": w(p["w_cd1"]), "b_cd1": b(p["b_cd1"]),
        "w_cd2": w(p["w_cd2"]), "b_cd2": b(p["b_cd2"]),
        "w_fp1": w(p["w_fp1"]), "b_fp1": b(p["b_fp1"]),
        "w_fp2": w(p["w_fp2"]), "b_fp2": b(p["b_fp2"]),
        "w_h1u_cd": w(w_h1u_cd), "w_h1u_ff": w(w_h1u_ff), "b_h1u": b(b_h1u),
        "w_h1r_cd": w(w_h1r_cd), "w_h1r_ff": w(w_h1r_ff), "b_h1r": b(b_h1r),
        "w_u2": w(p["w_u2"]), "b_u2": b(p["b_u2"]),
        "w_u3": w(p["w_u3"]), "b_u3": b(p["b_u3"]),
        "w_out_u": w(w_out_u), "w_out_r": w(w_out_r), "b_out": b(b_out),
    }


# -------------------------------- wrapper ----------------------------------

def cross_depot_gnn_forward(x, params, *, num_depots):
    B, din = x.shape
    out_pad = ((4 + num_depots + 127) // 128) * 128   # lane-dense output slab
    fused = fuse_params(params, num_depots=num_depots, out_pad=out_pad)
    weights = [fused[n] for n in FUSED_WEIGHT_NAMES]

    # Tile policy: for B > 8 guarantee >= 2 grid steps (v7x megacore), with a
    # cap of 512 rows per tile to amortize per-step overhead on large batches.
    if B <= 8:
        tb = B
    else:
        tb = min(512, ((pl.cdiv(B, 2) + 7) // 8) * 8)
    grid = (pl.cdiv(B, tb),)

    in_specs = [pl.BlockSpec((tb, din), lambda i: (i, 0))] + [
        pl.BlockSpec(wt.shape, lambda i: (0, 0)) for wt in weights
    ]
    out_specs = pl.BlockSpec((tb, out_pad), lambda i: (i, 0))
    out_shape = jax.ShapeDtypeStruct((B, out_pad), jnp.float32)

    flops = int(2 * B * sum(fused[n].shape[0] * fused[n].shape[1]
                            for n in MATMUL_WEIGHT_NAMES))
    bytes_accessed = int(x.size * x.dtype.itemsize + B * out_pad * 4
                         + sum(int(v.size) * v.dtype.itemsize
                               for v in fused.values()))
    transcendentals = int(B * out_pad * 4)

    packed = pl.pallas_call(
        functools.partial(gnn_kernel, num_depots),
        grid=grid,
        in_specs=in_specs,
        out_specs=out_specs,
        out_shape=out_shape,
        compiler_params=pltpu.CompilerParams(
            dimension_semantics=("parallel",)),
        cost_estimate=pl.CostEstimate(
            flops=flops, transcendentals=transcendentals,
            bytes_accessed=bytes_accessed),
    )(x, *weights)

    learned_weights = jax.nn.softmax(params["scoring_weights"], axis=0)
    return {
        "assignment_score": packed[:, 0],
        "cross_depot_probability": packed[:, 1],
        "depot_preferences": packed[:, 4:4 + num_depots],
        "future_value": packed[:, 2],
        "raw_assignment_prob": packed[:, 3],
        "learned_weights": learned_weights,
    }


# ------------------------- deterministic parameters ------------------------

def init_params(key, input_dim, hidden_dim, num_depots):
    hh = hidden_dim // 2
    comb = hh + 32            # [attended | future]
    feat = comb + 64          # [attended | future | depot]

    shapes = {
        "w_emb": (input_dim, hidden_dim), "b_emb": (1, hidden_dim),
        "bn_g": (1, hidden_dim), "bn_b": (1, hidden_dim),
        "bn_mu": (1, hidden_dim), "bn_var": (1, hidden_dim),
        "w_cd1": (hidden_dim, hh), "b_cd1": (1, hh),
        "w_cd2": (hh, hh), "b_cd2": (1, hh),
        "w_fp1": (hh, 64), "b_fp1": (1, 64),
        "w_fp2": (64, 32), "b_fp2": (1, 32),
        "w_v": (hh, hh), "b_v": (1, hh),
        "w_o": (hh, hh), "b_o": (1, hh),
        "depot_mean": (1, 64),
        "w_u1": (feat, 256), "b_u1": (1, 256),
        "w_u2": (256, 128), "b_u2": (1, 128),
        "w_u3": (128, 64), "b_u3": (1, 64),
        "w_u4": (64, 1), "b_u4": (1, 1),
        "w_a1": (feat, 64), "b_a1": (1, 64),
        "w_a2": (64, 1), "b_a2": (1, 1),
        "w_c1": (comb, 32), "b_c1": (1, 32),
        "w_c2": (32, 1), "b_c2": (1, 1),
        "w_d1": (comb, 64), "b_d1": (1, 64),
        "w_d2": (64, num_depots), "b_d2": (1, num_depots),
        "w_ve1": (comb, 32), "b_ve1": (1, 32),
        "w_ve2": (32, 1), "b_ve2": (1, 1),
    }

    params = {}
    keys = jax.random.split(key, len(shapes))
    for (name, shape), k in zip(shapes.items(), keys):
        if name.startswith("w_") or name == "depot_mean":
            fan_in = shape[0]
            params[name] = (jax.random.normal(k, shape, jnp.float32)
                            / jnp.sqrt(float(fan_in))).astype(jnp.float32)
        elif name.startswith("b_"):
            params[name] = 0.01 * jax.random.normal(k, shape, jnp.float32)
        elif name == "bn_g":
            params[name] = 1.0 + 0.01 * jax.random.normal(k, shape, jnp.float32)
        elif name == "bn_b":
            params[name] = 0.01 * jax.random.normal(k, shape, jnp.float32)
        elif name == "bn_mu":
            params[name] = 0.05 * jax.random.normal(k, shape, jnp.float32)
        elif name == "bn_var":
            params[name] = 0.5 + jnp.abs(jax.random.normal(k, shape, jnp.float32))

    params["temp"] = jnp.ones((1, 1), jnp.float32)
    params["scoring_weights"] = jnp.array([0.4, 0.3, 0.2, 0.1], jnp.float32)
    return params


# ---------------------------------- main ------------------------------------

if __name__ == "__main__":
    # TODO(synk): only the eval path (training=False, depot_ids=None) is
    # implemented; dropout / training-mode score blending are inactive here.
    input_dim, hidden_dim, num_depots, batch = 32, 64, 5, 16

    key = jax.random.PRNGKey(0)
    kx, kp = jax.random.split(key)
    x = jax.random.normal(kx, (batch, input_dim), jnp.float32)
    params = init_params(kp, input_dim, hidden_dim, num_depots)

    out = cross_depot_gnn_forward(x, params, num_depots=num_depots)
    out = jax.tree_util.tree_map(jax.block_until_ready, out)

    assert out["assignment_score"].shape == (batch,)
    assert out["cross_depot_probability"].shape == (batch,)
    assert out["depot_preferences"].shape == (batch, num_depots)
    assert out["future_value"].shape == (batch,)
    assert out["raw_assignment_prob"].shape == (batch,)
    assert out["learned_weights"].shape == (4,)
    print("KERNEL_OK")
</pallas_src>

<mosaic_0001>
module attributes {stable_mosaic.version = 11 : i64} {
  func.func @gnn_kernel(%arg0: i32, %arg1: memref<8x32xf32, #tpu.memory_space<vmem>>, %arg2: memref<32x64xbf16, #tpu.memory_space<vmem>>, %arg3: memref<1x64xf32, #tpu.memory_space<vmem>>, %arg4: memref<64x32xbf16, #tpu.memory_space<vmem>>, %arg5: memref<1x32xf32, #tpu.memory_space<vmem>>, %arg6: memref<32x32xbf16, #tpu.memory_space<vmem>>, %arg7: memref<1x32xf32, #tpu.memory_space<vmem>>, %arg8: memref<32x64xbf16, #tpu.memory_space<vmem>>, %arg9: memref<1x64xf32, #tpu.memory_space<vmem>>, %arg10: memref<64x32xbf16, #tpu.memory_space<vmem>>, %arg11: memref<1x32xf32, #tpu.memory_space<vmem>>, %arg12: memref<32x256xbf16, #tpu.memory_space<vmem>>, %arg13: memref<32x256xbf16, #tpu.memory_space<vmem>>, %arg14: memref<1x256xf32, #tpu.memory_space<vmem>>, %arg15: memref<32x192xbf16, #tpu.memory_space<vmem>>, %arg16: memref<32x192xbf16, #tpu.memory_space<vmem>>, %arg17: memref<1x192xf32, #tpu.memory_space<vmem>>, %arg18: memref<256x128xbf16, #tpu.memory_space<vmem>>, %arg19: memref<1x128xf32, #tpu.memory_space<vmem>>, %arg20: memref<128x64xbf16, #tpu.memory_space<vmem>>, %arg21: memref<1x64xf32, #tpu.memory_space<vmem>>, %arg22: memref<64x128xbf16, #tpu.memory_space<vmem>>, %arg23: memref<192x128xbf16, #tpu.memory_space<vmem>>, %arg24: memref<1x128xf32, #tpu.memory_space<vmem>>, %arg25: memref<8x128xf32, #tpu.memory_space<vmem>>) attributes {dimension_semantics = [#tpu.dimension_semantics<parallel>], iteration_bounds = array<i64: 2>, scalar_prefetch = 0 : i64, scratch_operands = 0 : i64, tpu.core_type = #tpu.core_type<tc>, window_params = [{transform_indices = @transform_0, window_bounds = array<i64: 8, 32>}, {pipeline_mode = #tpu.pipeline_mode<synchronous>, transform_indices = @transform_1, window_bounds = array<i64: 32, 64>}, {pipeline_mode = #tpu.pipeline_mode<synchronous>, transform_indices = @transform_2, window_bounds = array<i64: 1, 64>}, {pipeline_mode = #tpu.pipeline_mode<synchronous>, transform_indices = @transform_3, window_bounds = array<i64: 64, 32>}, {pipeline_mode = #tpu.pipeline_mode<synchronous>, transform_indices = @transform_4, window_bounds = array<i64: 1, 32>}, {pipeline_mode = #tpu.pipeline_mode<synchronous>, transform_indices = @transform_5, window_bounds = array<i64: 32, 32>}, {pipeline_mode = #tpu.pipeline_mode<synchronous>, transform_indices = @transform_6, window_bounds = array<i64: 1, 32>}, {pipeline_mode = #tpu.pipeline_mode<synchronous>, transform_indices = @transform_7, window_bounds = array<i64: 32, 64>}, {pipeline_mode = #tpu.pipeline_mode<synchronous>, transform_indices = @transform_8, window_bounds = array<i64: 1, 64>}, {pipeline_mode = #tpu.pipeline_mode<synchronous>, transform_indices = @transform_9, window_bounds = array<i64: 64, 32>}, {pipeline_mode = #tpu.pipeline_mode<synchronous>, transform_indices = @transform_10, window_bounds = array<i64: 1, 32>}, {pipeline_mode = #tpu.pipeline_mode<synchronous>, transform_indices = @transform_11, window_bounds = array<i64: 32, 256>}, {pipeline_mode = #tpu.pipeline_mode<synchronous>, transform_indices = @transform_12, window_bounds = array<i64: 32, 256>}, {pipeline_mode = #tpu.pipeline_mode<synchronous>, transform_indices = @transform_13, window_bounds = array<i64: 1, 256>}, {pipeline_mode = #tpu.pipeline_mode<synchronous>, transform_indices = @transform_14, window_bounds = array<i64: 32, 192>}, {pipeline_mode = #tpu.pipeline_mode<synchronous>, transform_indices = @transform_15, window_bounds = array<i64: 32, 192>}, {pipeline_mode = #tpu.pipeline_mode<synchronous>, transform_indices = @transform_16, window_bounds = array<i64: 1, 192>}, {pipeline_mode = #tpu.pipeline_mode<synchronous>, transform_indices = @transform_17, window_bounds = array<i64: 256, 128>}, {pipeline_mode = #tpu.pipeline_mode<synchronous>, transform_indices = @transform_18, window_bounds = array<i64: 1, 128>}, {pipeline_mode = #tpu.pipeline_mode<synchronous>, transform_indices = @transform_19, window_bounds = array<i64: 128, 64>}, {pipeline_mode = #tpu.pipeline_mode<synchronous>, transform_indices = @transform_20, window_bounds = array<i64: 1, 64>}, {pipeline_mode = #tpu.pipeline_mode<synchronous>, transform_indices = @transform_21, window_bounds = array<i64: 64, 128>}, {pipeline_mode = #tpu.pipeline_mode<synchronous>, transform_indices = @transform_22, window_bounds = array<i64: 192, 128>}, {pipeline_mode = #tpu.pipeline_mode<synchronous>, transform_indices = @transform_23, window_bounds = array<i64: 1, 128>}, {transform_indices = @transform_24, window_bounds = array<i64: 8, 128>}]} {
    %c0 = arith.constant 0 : index
    %c0_0 = arith.constant 0 : index
    %0 = vector.load %arg1[%c0, %c0_0] : memref<8x32xf32, #tpu.memory_space<vmem>>, vector<8x32xf32>
    %1 = arith.truncf %0 : vector<8x32xf32> to vector<8x32xbf16>
    %c0_1 = arith.constant 0 : index
    %c0_2 = arith.constant 0 : index
    %2 = vector.load %arg2[%c0_1, %c0_2] : memref<32x64xbf16, #tpu.memory_space<vmem>>, vector<32x64xbf16>
    %cst = arith.constant dense<0.000000e+00> : vector<8x64xf32>
    %3 = tpu.matmul %1, %2, %cst {dimension_numbers = #tpu.dot_dimension_numbers<[1], [0], [0], [1], [0, 0, 1, 1], [], []>} : vector<8x32xbf16>, vector<32x64xbf16>, vector<8x64xf32> -> vector<8x64xf32>
    %c0_3 = arith.constant 0 : index
    %c0_4 = arith.constant 0 : index
    %4 = vector.load %arg3[%c0_3, %c0_4] : memref<1x64xf32, #tpu.memory_space<vmem>>, vector<1x64xf32>
    %5 = vector.broadcast %4 : vector<1x64xf32> to vector<8x64xf32>
    %6 = arith.addf %3, %5 : vector<8x64xf32>
    %cst_5 = arith.constant 0.000000e+00 : f32
    %7 = vector.broadcast %cst_5 : f32 to vector<8x64xf32>
    %8 = arith.maximumf %6, %7 : vector<8x64xf32>
    %9 = arith.truncf %8 : vector<8x64xf32> to vector<8x64xbf16>
    %c0_6 = arith.constant 0 : index
    %c0_7 = arith.constant 0 : index
    %10 = vector.load %arg4[%c0_6, %c0_7] : memref<64x32xbf16, #tpu.memory_space<vmem>>, vector<64x32xbf16>
    %cst_8 = arith.constant dense<0.000000e+00> : vector<8x32xf32>
    %11 = tpu.matmul %9, %10, %cst_8 {dimension_numbers = #tpu.dot_dimension_numbers<[1], [0], [0], [1], [0, 0, 1, 1], [], []>} : vector<8x64xbf16>, vector<64x32xbf16>, vector<8x32xf32> -> vector<8x32xf32>
    %c0_9 = arith.constant 0 : index
    %c0_10 = arith.constant 0 : index
    %12 = vector.load %arg5[%c0_9, %c0_10] : memref<1x32xf32, #tpu.memory_space<vmem>>, vector<1x32xf32>
    %13 = vector.broadcast %12 : vector<1x32xf32> to vector<8x32xf32>
    %14 = arith.addf %11, %13 : vector<8x32xf32>
    %cst_11 = arith.constant 0.000000e+00 : f32
    %15 = vector.broadcast %cst_11 : f32 to vector<8x32xf32>
    %16 = arith.maximumf %14, %15 : vector<8x32xf32>
    %17 = arith.truncf %16 : vector<8x32xf32> to vector<8x32xbf16>
    %c0_12 = arith.constant 0 : index
    %c0_13 = arith.constant 0 : index
    %18 = vector.load %arg6[%c0_12, %c0_13] : memref<32x32xbf16, #tpu.memory_space<vmem>>, vector<32x32xbf16>
    %cst_14 = arith.constant dense<0.000000e+00> : vector<8x32xf32>
    %19 = tpu.matmul %17, %18, %cst_14 {dimension_numbers = #tpu.dot_dimension_numbers<[1], [0], [0], [1], [0, 0, 1, 1], [], []>} : vector<8x32xbf16>, vector<32x32xbf16>, vector<8x32xf32> -> vector<8x32xf32>
    %c0_15 = arith.constant 0 : index
    %c0_16 = arith.constant 0 : index
    %20 = vector.load %arg7[%c0_15, %c0_16] : memref<1x32xf32, #tpu.memory_space<vmem>>, vector<1x32xf32>
    %21 = vector.broadcast %20 : vector<1x32xf32> to vector<8x32xf32>
    %22 = arith.addf %19, %21 : vector<8x32xf32>
    %cst_17 = arith.constant 0.000000e+00 : f32
    %23 = vector.broadcast %cst_17 : f32 to vector<8x32xf32>
    %24 = arith.maximumf %22, %23 : vector<8x32xf32>
    %25 = arith.truncf %24 : vector<8x32xf32> to vector<8x32xbf16>
    %c0_18 = arith.constant 0 : index
    %c0_19 = arith.constant 0 : index
    %26 = vector.load %arg8[%c0_18, %c0_19] : memref<32x64xbf16, #tpu.memory_space<vmem>>, vector<32x64xbf16>
    %cst_20 = arith.constant dense<0.000000e+00> : vector<8x64xf32>
    %27 = tpu.matmul %25, %26, %cst_20 {dimension_numbers = #tpu.dot_dimension_numbers<[1], [0], [0], [1], [0, 0, 1, 1], [], []>} : vector<8x32xbf16>, vector<32x64xbf16>, vector<8x64xf32> -> vector<8x64xf32>
    %c0_21 = arith.constant 0 : index
    %c0_22 = arith.constant 0 : index
    %28 = vector.load %arg9[%c0_21, %c0_22] : memref<1x64xf32, #tpu.memory_space<vmem>>, vector<1x64xf32>
    %29 = vector.broadcast %28 : vector<1x64xf32> to vector<8x64xf32>
    %30 = arith.addf %27, %29 : vector<8x64xf32>
    %cst_23 = arith.constant 0.000000e+00 : f32
    %31 = vector.broadcast %cst_23 : f32 to vector<8x64xf32>
    %32 = arith.maximumf %30, %31 : vector<8x64xf32>
    %33 = arith.truncf %32 : vector<8x64xf32> to vector<8x64xbf16>
    %c0_24 = arith.constant 0 : index
    %c0_25 = arith.constant 0 : index
    %34 = vector.load %arg10[%c0_24, %c0_25] : memref<64x32xbf16, #tpu.memory_space<vmem>>, vector<64x32xbf16>
    %cst_26 = arith.constant dense<0.000000e+00> : vector<8x32xf32>
    %35 = tpu.matmul %33, %34, %cst_26 {dimension_numbers = #tpu.dot_dimension_numbers<[1], [0], [0], [1], [0, 0, 1, 1], [], []>} : vector<8x64xbf16>, vector<64x32xbf16>, vector<8x32xf32> -> vector<8x32xf32>
    %c0_27 = arith.constant 0 : index
    %c0_28 = arith.constant 0 : index
    %36 = vector.load %arg11[%c0_27, %c0_28] : memref<1x32xf32, #tpu.memory_space<vmem>>, vector<1x32xf32>
    %37 = vector.broadcast %36 : vector<1x32xf32> to vector<8x32xf32>
    %38 = arith.addf %35, %37 : vector<8x32xf32>
    %cst_29 = arith.constant 0.000000e+00 : f32
    %39 = vector.broadcast %cst_29 : f32 to vector<8x32xf32>
    %40 = arith.maximumf %38, %39 : vector<8x32xf32>
    %41 = arith.truncf %40 : vector<8x32xf32> to vector<8x32xbf16>
    %c0_30 = arith.constant 0 : index
    %c0_31 = arith.constant 0 : index
    %42 = vector.load %arg12[%c0_30, %c0_31] : memref<32x256xbf16, #tpu.memory_space<vmem>>, vector<32x256xbf16>
    %cst_32 = arith.constant dense<0.000000e+00> : vector<8x256xf32>
    %43 = tpu.matmul %25, %42, %cst_32 {dimension_numbers = #tpu.dot_dimension_numbers<[1], [0], [0], [1], [0, 0, 1, 1], [], []>} : vector<8x32xbf16>, vector<32x256xbf16>, vector<8x256xf32> -> vector<8x256xf32>
    %c0_33 = arith.constant 0 : index
    %c0_34 = arith.constant 0 : index
    %44 = vector.load %arg13[%c0_33, %c0_34] : memref<32x256xbf16, #tpu.memory_space<vmem>>, vector<32x256xbf16>
    %cst_35 = arith.constant dense<0.000000e+00> : vector<8x256xf32>
    %45 = tpu.matmul %41, %44, %cst_35 {dimension_numbers = #tpu.dot_dimension_numbers<[1], [0], [0], [1], [0, 0, 1, 1], [], []>} : vector<8x32xbf16>, vector<32x256xbf16>, vector<8x256xf32> -> vector<8x256xf32>
    %46 = arith.addf %43, %45 : vector<8x256xf32>
    %c0_36 = arith.constant 0 : index
    %c0_37 = arith.constant 0 : index
    %47 = vector.load %arg14[%c0_36, %c0_37] : memref<1x256xf32, #tpu.memory_space<vmem>>, vector<1x256xf32>
    %48 = vector.broadcast %47 : vector<1x256xf32> to vector<8x256xf32>
    %49 = arith.addf %46, %48 : vector<8x256xf32>
    %cst_38 = arith.constant 0.000000e+00 : f32
    %50 = vector.broadcast %cst_38 : f32 to vector<8x256xf32>
    %51 = arith.maximumf %49, %50 : vector<8x256xf32>
    %52 = arith.truncf %51 : vector<8x256xf32> to vector<8x256xbf16>
    %c0_39 = arith.constant 0 : index
    %c0_40 = arith.constant 0 : index
    %53 = vector.load %arg15[%c0_39, %c0_40] : memref<32x192xbf16, #tpu.memory_space<vmem>>, vector<32x192xbf16>
    %cst_41 = arith.constant dense<0.000000e+00> : vector<8x192xf32>
    %54 = tpu.matmul %25, %53, %cst_41 {dimension_numbers = #tpu.dot_dimension_numbers<[1], [0], [0], [1], [0, 0, 1, 1], [], []>} : vector<8x32xbf16>, vector<32x192xbf16>, vector<8x192xf32> -> vector<8x192xf32>
    %c0_42 = arith.constant 0 : index
    %c0_43 = arith.constant 0 : index
    %55 = vector.load %arg16[%c0_42, %c0_43] : memref<32x192xbf16, #tpu.memory_space<vmem>>, vector<32x192xbf16>
    %cst_44 = arith.constant dense<0.000000e+00> : vector<8x192xf32>
    %56 = tpu.matmul %41, %55, %cst_44 {dimension_numbers = #tpu.dot_dimension_numbers<[1], [0], [0], [1], [0, 0, 1, 1], [], []>} : vector<8x32xbf16>, vector<32x192xbf16>, vector<8x192xf32> -> vector<8x192xf32>
    %57 = arith.addf %54, %56 : vector<8x192xf32>
    %c0_45 = arith.constant 0 : index
    %c0_46 = arith.constant 0 : index
    %58 = vector.load %arg17[%c0_45, %c0_46] : memref<1x192xf32, #tpu.memory_space<vmem>>, vector<1x192xf32>
    %59 = vector.broadcast %58 : vector<1x192xf32> to vector<8x192xf32>
    %60 = arith.addf %57, %59 : vector<8x192xf32>
    %cst_47 = arith.constant 0.000000e+00 : f32
    %61 = vector.broadcast %cst_47 : f32 to vector<8x192xf32>
    %62 = arith.maximumf %60, %61 : vector<8x192xf32>
    %63 = arith.truncf %62 : vector<8x192xf32> to vector<8x192xbf16>
    %c0_48 = arith.constant 0 : index
    %c0_49 = arith.constant 0 : index
    %64 = vector.load %arg18[%c0_48, %c0_49] : memref<256x128xbf16, #tpu.memory_space<vmem>>, vector<256x128xbf16>
    %cst_50 = arith.constant dense<0.000000e+00> : vector<8x128xf32>
    %65 = tpu.matmul %52, %64, %cst_50 {dimension_numbers = #tpu.dot_dimension_numbers<[1], [0], [0], [1], [0, 0, 1, 1], [], []>} : vector<8x256xbf16>, vector<256x128xbf16>, vector<8x128xf32> -> vector<8x128xf32>
    %c0_51 = arith.constant 0 : index
    %c0_52 = arith.constant 0 : index
    %66 = vector.load %arg19[%c0_51, %c0_52] : memref<1x128xf32, #tpu.memory_space<vmem>>, vector<1x128xf32>
    %67 = vector.broadcast %66 : vector<1x128xf32> to vector<8x128xf32>
    %68 = arith.addf %65, %67 : vector<8x128xf32>
    %cst_53 = arith.constant 0.000000e+00 : f32
    %69 = vector.broadcast %cst_53 : f32 to vector<8x128xf32>
    %70 = arith.maximumf %68, %69 : vector<8x128xf32>
    %71 = arith.truncf %70 : vector<8x128xf32> to vector<8x128xbf16>
    %c0_54 = arith.constant 0 : index
    %c0_55 = arith.constant 0 : index
    %72 = vector.load %arg20[%c0_54, %c0_55] : memref<128x64xbf16, #tpu.memory_space<vmem>>, vector<128x64xbf16>
    %cst_56 = arith.constant dense<0.000000e+00> : vector<8x64xf32>
    %73 = tpu.matmul %71, %72, %cst_56 {dimension_numbers = #tpu.dot_dimension_numbers<[1], [0], [0], [1], [0, 0, 1, 1], [], []>} : vector<8x128xbf16>, vector<128x64xbf16>, vector<8x64xf32> -> vector<8x64xf32>
    %c0_57 = arith.constant 0 : index
    %c0_58 = arith.constant 0 : index
    %74 = vector.load %arg21[%c0_57, %c0_58] : memref<1x64xf32, #tpu.memory_space<vmem>>, vector<1x64xf32>
    %75 = vector.broadcast %74 : vector<1x64xf32> to vector<8x64xf32>
    %76 = arith.addf %73, %75 : vector<8x64xf32>
    %cst_59 = arith.constant 0.000000e+00 : f32
    %77 = vector.broadcast %cst_59 : f32 to vector<8x64xf32>
    %78 = arith.maximumf %76, %77 : vector<8x64xf32>
    %79 = arith.truncf %78 : vector<8x64xf32> to vector<8x64xbf16>
    %c0_60 = arith.constant 0 : index
    %c0_61 = arith.constant 0 : index
    %80 = vector.load %arg22[%c0_60, %c0_61] : memref<64x128xbf16, #tpu.memory_space<vmem>>, vector<64x128xbf16>
    %cst_62 = arith.constant dense<0.000000e+00> : vector<8x128xf32>
    %81 = tpu.matmul %79, %80, %cst_62 {dimension_numbers = #tpu.dot_dimension_numbers<[1], [0], [0], [1], [0, 0, 1, 1], [], []>} : vector<8x64xbf16>, vector<64x128xbf16>, vector<8x128xf32> -> vector<8x128xf32>
    %c0_63 = arith.constant 0 : index
    %c0_64 = arith.constant 0 : index
    %82 = vector.load %arg23[%c0_63, %c0_64] : memref<192x128xbf16, #tpu.memory_space<vmem>>, vector<192x128xbf16>
    %cst_65 = arith.constant dense<0.000000e+00> : vector<8x128xf32>
    %83 = tpu.matmul %63, %82, %cst_65 {dimension_numbers = #tpu.dot_dimension_numbers<[1], [0], [0], [1], [0, 0, 1, 1], [], []>} : vector<8x192xbf16>, vector<192x128xbf16>, vector<8x128xf32> -> vector<8x128xf32>
    %84 = arith.addf %81, %83 : vector<8x128xf32>
    %c0_66 = arith.constant 0 : index
    %c0_67 = arith.constant 0 : index
    %85 = vector.load %arg24[%c0_66, %c0_67] : memref<1x128xf32, #tpu.memory_space<vmem>>, vector<1x128xf32>
    %86 = vector.broadcast %85 : vector<1x128xf32> to vector<8x128xf32>
    %87 = arith.addf %84, %86 : vector<8x128xf32>
    %88 = tpu.iota {dimensions = array<i32: 1>} : vector<8x128xi32>
    %c0_i32 = arith.constant 0 : i32
    %89 = vector.broadcast %c0_i32 : i32 to vector<8x128xi32>
    %90 = arith.cmpi eq, %88, %89 : vector<8x128xi32>
    %c1_i32 = arith.constant 1 : i32
    %91 = vector.broadcast %c1_i32 : i32 to vector<8x128xi32>
    %92 = arith.cmpi eq, %88, %91 : vector<8x128xi32>
    %93 = arith.ori %90, %92 : vector<8x128xi1>
    %c3_i32 = arith.constant 3 : i32
    %94 = vector.broadcast %c3_i32 : i32 to vector<8x128xi32>
    %95 = arith.cmpi eq, %88, %94 : vector<8x128xi32>
    %96 = arith.ori %93, %95 : vector<8x128xi1>
    %c2_i32 = arith.constant 2 : i32
    %97 = vector.broadcast %c2_i32 : i32 to vector<8x128xi32>
    %98 = arith.cmpi eq, %88, %97 : vector<8x128xi32>
    %c4_i32 = arith.constant 4 : i32
    %99 = vector.broadcast %c4_i32 : i32 to vector<8x128xi32>
    %100 = arith.cmpi sge, %88, %99 : vector<8x128xi32>
    %c9_i32 = arith.constant 9 : i32
    %101 = vector.broadcast %c9_i32 : i32 to vector<8x128xi32>
    %102 = arith.cmpi slt, %88, %101 : vector<8x128xi32>
    %103 = arith.andi %100, %102 : vector<8x128xi1>
    %cst_68 = arith.constant -1.000000e+30 : f32
    %104 = vector.broadcast %cst_68 : f32 to vector<8x128xf32>
    %105 = arith.select %103, %87, %104 : vector<8x128xi1>, vector<8x128xf32>
    %cst_69 = arith.constant dense<0xFF800000> : vector<8xf32>
    %106 = vector.multi_reduction <maximumf>, %105, %cst_69 [1] : vector<8x128xf32> to vector<8xf32>
    %107 = vector.shape_cast %106 : vector<8xf32> to vector<8x1xf32>
    %108 = vector.broadcast %107 : vector<8x1xf32> to vector<8x128xf32>
    %109 = arith.subf %105, %108 : vector<8x128xf32>
    %110 = math.exp %109 : vector<8x128xf32>
    %cst_70 = arith.constant 0.000000e+00 : f32
    %111 = vector.broadcast %cst_70 : f32 to vector<8x128xf32>
    %112 = arith.select %103, %110, %111 : vector<8x128xi1>, vector<8x128xf32>
    %cst_71 = arith.constant dense<0.000000e+00> : vector<8xf32>
    %113 = vector.multi_reduction <add>, %112, %cst_71 [1] : vector<8x128xf32> to vector<8xf32>
    %114 = vector.shape_cast %113 : vector<8xf32> to vector<8x1xf32>
    %115 = vector.broadcast %114 : vector<8x1xf32> to vector<8x128xf32>
    %116 = arith.divf %112, %115 : vector<8x128xf32>
    %117 = arith.negf %87 : vector<8x128xf32>
    %118 = math.exp %117 : vector<8x128xf32>
    %cst_72 = arith.constant 1.000000e+00 : f32
    %119 = vector.broadcast %cst_72 : f32 to vector<8x128xf32>
    %120 = arith.addf %119, %118 : vector<8x128xf32>
    %121 = arith.divf %119, %120 : vector<8x128xf32>
    %122 = math.tanh %87 : vector<8x128xf32>
    %123 = arith.select %98, %122, %116 : vector<8x128xi1>, vector<8x128xf32>
    %124 = arith.select %96, %121, %123 : vector<8x128xi1>, vector<8x128xf32>
    %c0_73 = arith.constant 0 : index
    %c0_74 = arith.constant 0 : index
    %125 = vector.load %arg25[%c0_73, %c0_74] : memref<8x128xf32, #tpu.memory_space<vmem>>, vector<8x128xf32>
    tpu.vector_store %arg25[%c0_73, %c0_74], %124 {strides = array<i32>} : memref<8x128xf32, #tpu.memory_space<vmem>>, vector<8x128xf32>,
    return
  }
  func.func @transform_0(%arg0: i32) -> (i32, i32) {
    %c0_i32 = arith.constant 0 : i32
    %c0_i32_0 = arith.constant 0 : i32
    return %arg0, %c0_i32 : i32, i32
  }
  func.func @transform_1(%arg0: i32) -> (i32, i32) {
    %c0_i32 = arith.constant 0 : i32
    %c0_i32_0 = arith.constant 0 : i32
    %c0_i32_1 = arith.constant 0 : i32
    return %c0_i32, %c0_i32_0 : i32, i32
  }
  func.func @transform_2(%arg0: i32) -> (i32, i32) {
    %c0_i32 = arith.constant 0 : i32
    %c0_i32_0 = arith.constant 0 : i32
    %c0_i32_1 = arith.constant 0 : i32
    return %c0_i32, %c0_i32_0 : i32, i32
  }
  func.func @transform_3(%arg0: i32) -> (i32, i32) {
    %c0_i32 = arith.constant 0 : i32
    %c0_i32_0 = arith.constant 0 : i32
    %c0_i32_1 = arith.constant 0 : i32
    return %c0_i32, %c0_i32_0 : i32, i32
  }
  func.func @transform_4(%arg0: i32) -> (i32, i32) {
    %c0_i32 = arith.constant 0 : i32
    %c0_i32_0 = arith.constant 0 : i32
    %c0_i32_1 = arith.constant 0 : i32
    return %c0_i32, %c0_i32_0 : i32, i32
  }
  func.func @transform_5(%arg0: i32) -> (i32, i32) {
    %c0_i32 = arith.constant 0 : i32
    %c0_i32_0 = arith.constant 0 : i32
    %c0_i32_1 = arith.constant 0 : i32
    return %c0_i32, %c0_i32_0 : i32, i32
  }
  func.func @transform_6(%arg0: i32) -> (i32, i32) {
    %c0_i32 = arith.constant 0 : i32
    %c0_i32_0 = arith.constant 0 : i32
    %c0_i32_1 = arith.constant 0 : i32
    return %c0_i32, %c0_i32_0 : i32, i32
  }
  func.func @transform_7(%arg0: i32) -> (i32, i32) {
    %c0_i32 = arith.constant 0 : i32
    %c0_i32_0 = arith.constant 0 : i32
    %c0_i32_1 = arith.constant 0 : i32
    return %c0_i32, %c0_i32_0 : i32, i32
  }
  func.func @transform_8(%arg0: i32) -> (i32, i32) {
    %c0_i32 = arith.constant 0 : i32
    %c0_i32_0 = arith.constant 0 : i32
    %c0_i32_1 = arith.constant 0 : i32
    return %c0_i32, %c0_i32_0 : i32, i32
  }
  func.func @transform_9(%arg0: i32) -> (i32, i32) {
    %c0_i32 = arith.constant 0 : i32
    %c0_i32_0 = arith.constant 0 : i32
    %c0_i32_1 = arith.constant 0 : i32
    return %c0_i32, %c0_i32_0 : i32, i32
  }
  func.func @transform_10(%arg0: i32) -> (i32, i32) {
    %c0_i32 = arith.constant 0 : i32
    %c0_i32_0 = arith.constant 0 : i32
    %c0_i32_1 = arith.constant 0 : i32
    return %c0_i32, %c0_i32_0 : i32, i32
  }
  func.func @transform_11(%arg0: i32) -> (i32, i32) {
    %c0_i32 = arith.constant 0 : i32
    %c0_i32_0 = arith.constant 0 : i32
    %c0_i32_1 = arith.constant 0 : i32
    return %c0_i32, %c0_i32_0 : i32, i32
  }
  func.func @transform_12(%arg0: i32) -> (i32, i32) {
    %c0_i32 = arith.constant 0 : i32
    %c0_i32_0 = arith.constant 0 : i32
    %c0_i32_1 = arith.constant 0 : i32
    return %c0_i32, %c0_i32_0 : i32, i32
  }
  func.func @transform_13(%arg0: i32) -> (i32, i32) {
    %c0_i32 = arith.constant 0 : i32
    %c0_i32_0 = arith.constant 0 : i32
    %c0_i32_1 = arith.constant 0 : i32
    return %c0_i32, %c0_i32_0 : i32, i32
  }
  func.func @transform_14(%arg0: i32) -> (i32, i32) {
    %c0_i32 = arith.constant 0 : i32
    %c0_i32_0 = arith.constant 0 : i32
    %c0_i32_1 = arith.constant 0 : i32
    return %c0_i32, %c0_i32_0 : i32, i32
  }
  func.func @transform_15(%arg0: i32) -> (i32, i32) {
    %c0_i32 = arith.constant 0 : i32
    %c0_i32_0 = arith.constant 0 : i32
    %c0_i32_1 = arith.constant 0 : i32
    return %c0_i32, %c0_i32_0 : i32, i32
  }
  func.func @transform_16(%arg0: i32) -> (i32, i32) {
    %c0_i32 = arith.constant 0 : i32
    %c0_i32_0 = arith.constant 0 : i32
    %c0_i32_1 = arith.constant 0 : i32
    return %c0_i32, %c0_i32_0 : i32, i32
  }
  func.func @transform_17(%arg0: i32) -> (i32, i32) {
    %c0_i32 = arith.constant 0 : i32
    %c0_i32_0 = arith.constant 0 : i32
    %c0_i32_1 = arith.constant 0 : i32
    return %c0_i32, %c0_i32_0 : i32, i32
  }
  func.func @transform_18(%arg0: i32) -> (i32, i32) {
    %c0_i32 = arith.constant 0 : i32
    %c0_i32_0 = arith.constant 0 : i32
    %c0_i32_1 = arith.constant 0 : i32
    return %c0_i32, %c0_i32_0 : i32, i32
  }
  func.func @transform_19(%arg0: i32) -> (i32, i32) {
    %c0_i32 = arith.constant 0 : i32
    %c0_i32_0 = arith.constant 0 : i32
    %c0_i32_1 = arith.constant 0 : i32
    return %c0_i32, %c0_i32_0 : i32, i32
  }
  func.func @transform_20(%arg0: i32) -> (i32, i32) {
    %c0_i32 = arith.constant 0 : i32
    %c0_i32_0 = arith.constant 0 : i32
    %c0_i32_1 = arith.constant 0 : i32
    return %c0_i32, %c0_i32_0 : i32, i32
  }
  func.func @transform_21(%arg0: i32) -> (i32, i32) {
    %c0_i32 = arith.constant 0 : i32
    %c0_i32_0 = arith.constant 0 : i32
    %c0_i32_1 = arith.constant 0 : i32
    return %c0_i32, %c0_i32_0 : i32, i32
  }
  func.func @transform_22(%arg0: i32) -> (i32, i32) {
    %c0_i32 = arith.constant 0 : i32
    %c0_i32_0 = arith.constant 0 : i32
    %c0_i32_1 = arith.constant 0 : i32
    return %c0_i32, %c0_i32_0 : i32, i32
  }
  func.func @transform_23(%arg0: i32) -> (i32, i32) {
    %c0_i32 = arith.constant 0 : i32
    %c0_i32_0 = arith.constant 0 : i32
    %c0_i32_1 = arith.constant 0 : i32
    return %c0_i32, %c0_i32_0 : i32, i32
  }
  func.func @transform_24(%arg0: i32) -> (i32, i32) {
    %c0_i32 = arith.constant 0 : i32
    %c0_i32_0 = arith.constant 0 : i32
    return %arg0, %c0_i32 : i32, i32
  }
}

</mosaic_0001>

<llo_original>
// kernel: tpu_custom_call.1
$region0: #{tpu_custom_call.1}
  #allocation0 [shape = 'u32[]', space=smem, size = 0x4, offset = 0x4, fixed_abs, tag = 'smem constant byte address 0x4 - core index']
  #allocation1 [shape = 'u32[144,128]{1,0:T(1,128)}', space=vmem, size = 0x12000, scoped, tag = 'internal scratch']
  %s0 = inlined_call_operand.hbm [shape: f32[16,32], index: 0, kind: input, shape index: {}]
  %s1 = inlined_call_operand.hbm [shape: bf16[32,64], index: 1, kind: input, shape index: {}]
  %s2 = inlined_call_operand.hbm [shape: f32[1,64], index: 2, kind: input, shape index: {}]
  %s3 = inlined_call_operand.vmem [shape: bf16[64,32], index: 3, kind: input, shape index: {}]
  %s4 = inlined_call_operand.hbm [shape: f32[1,32], index: 4, kind: input, shape index: {}]
  %s5 = inlined_call_operand.hbm [shape: bf16[32,32], index: 5, kind: input, shape index: {}]
  %s6 = inlined_call_operand.hbm [shape: f32[1,32], index: 6, kind: input, shape index: {}]
  %s7 = inlined_call_operand.hbm [shape: bf16[32,64], index: 7, kind: input, shape index: {}]
  %s8 = inlined_call_operand.hbm [shape: f32[1,64], index: 8, kind: input, shape index: {}]
  %s9 = inlined_call_operand.vmem [shape: bf16[64,32], index: 9, kind: input, shape index: {}]
  %s10 = inlined_call_operand.hbm [shape: f32[1,32], index: 10, kind: input, shape index: {}]
  %s11 = inlined_call_operand.hbm [shape: bf16[32,256], index: 11, kind: input, shape index: {}]
  %s12 = inlined_call_operand.hbm [shape: bf16[32,256], index: 12, kind: input, shape index: {}]
  %s13 = inlined_call_operand.hbm [shape: f32[1,256], index: 13, kind: input, shape index: {}]
  %s14 = inlined_call_operand.hbm [shape: bf16[32,192], index: 14, kind: input, shape index: {}]
  %s15 = inlined_call_operand.hbm [shape: bf16[32,192], index: 15, kind: input, shape index: {}]
  %s16 = inlined_call_operand.hbm [shape: f32[1,192], index: 16, kind: input, shape index: {}]
  %s17 = inlined_call_operand.vmem [shape: bf16[256,128], index: 17, kind: input, shape index: {}]
  %s18 = inlined_call_operand.hbm [shape: f32[1,128], index: 18, kind: input, shape index: {}]
  %s19 = inlined_call_operand.vmem [shape: bf16[128,64], index: 19, kind: input, shape index: {}]
  %s20 = inlined_call_operand.vmem [shape: f32[1,64], index: 20, kind: input, shape index: {}]
  %s21 = inlined_call_operand.hbm [shape: bf16[64,128], index: 21, kind: input, shape index: {}]
  %s22 = inlined_call_operand.vmem [shape: bf16[192,128], index: 22, kind: input, shape index: {}]
  %s23 = inlined_call_operand.vmem [shape: f32[1,128], index: 23, kind: input, shape index: {}]
  %s24 = inlined_call_operand.hbm [shape: f32[16,128], index: 24, kind: output, shape index: {}]
  %s25 = sld [smem:[#allocation0]]
  $region197: #{tpu_custom_call.1} parent=0
    _
  %s27 = ssub.s32 1, %s25
  %s28 = scalar_select 0, %s27, %s25
  $region1: #{tpu_custom_call.1} parent=0
    #allocation2 [shape = 'u8[8192]{0}', space=vmem, size = 0x2000, scoped, tag = 'input window, operand 0']
    #allocation3 [shape = 's32[2]{0}', space=sflag, size = 0x8, scoped, tag = 'scoped memory for tpu_custom_call.1']
    #allocation4 [shape = 's32[2]{0}', space=sflag, size = 0x8, scoped, tag = 'scoped memory for tpu_custom_call.1']
    #allocation5 [shape = 'u8[8192]{0}', space=vmem, size = 0x2000, scoped, tag = 'input window, operand 1, single buffered']
    #allocation6 [shape = 's32[1]{0}', space=sflag, size = 0x4, scoped, tag = 'scoped memory for tpu_custom_call.1']
    #allocation7 [shape = 'u8[512]{0}', space=vmem, size = 0x400, scoped, tag = 'input window, operand 2, single buffered']
    #allocation8 [shape = 'u8[512]{0}', space=vmem, size = 0x400, scoped, tag = 'input window, operand 4, single buffered']
    #allocation9 [shape = 's32[1]{0}', space=sflag, size = 0x4, scoped, tag = 'scoped memory for tpu_custom_call.1']
    #allocation10 [shape = 'u8[8192]{0}', space=vmem, size = 0x2000, scoped, tag = 'input window, operand 5, single buffered']
    #allocation11 [shape = 'u8[512]{0}', space=vmem, size = 0x400, scoped, tag = 'input window, operand 6, single buffered']
    #allocation12 [shape = 's32[1]{0}', space=sflag, size = 0x4, scoped, tag = 'scoped memory for tpu_custom_call.1']
    #allocation13 [shape = 'u8[8192]{0}', space=vmem, size = 0x2000, scoped, tag = 'input window, operand 7, single buffered']
    #allocation14 [shape = 'u8[512]{0}', space=vmem, size = 0x400, scoped, tag = 'input window, operand 8, single buffered']
    #allocation15 [shape = 's32[1]{0}', space=sflag, size = 0x4, scoped, tag = 'scoped memory for tpu_custom_call.1']
    #allocation16 [shape = 'u8[512]{0}', space=vmem, size = 0x400, scoped, tag = 'input window, operand 10, single buffered']
    #allocation17 [shape = 'u8[16384]{0}', space=vmem, size = 0x4000, scoped, tag = 'input window, operand 11, single buffered']
    #allocation18 [shape = 's32[1]{0}', space=sflag, size = 0x4, scoped, tag = 'scoped memory for tpu_custom_call.1']
    #allocation19 [shape = 'u8[16384]{0}', space=vmem, size = 0x4000, scoped, tag = 'input window, operand 12, single buffered']
    #allocation20 [shape = 'u8[1024]{0}', space=vmem, size = 0x400, scoped, tag = 'input window, operand 13, single buffered']
    #allocation21 [shape = 's32[1]{0}', space=sflag, size = 0x4, scoped, tag = 'scoped memory for tpu_custom_call.1']
    #allocation22 [shape = 'u8[16384]{0}', space=vmem, size = 0x4000, scoped, tag = 'input window, operand 14, single buffered']
    #allocation23 [shape = 'u8[16384]{0}', space=vmem, size = 0x4000, scoped, tag = 'input window, operand 15, single buffered']
    #allocation24 [shape = 's32[1]{0}', space=sflag, size = 0x4, scoped, tag = 'scoped memory for tpu_custom_call.1']
    #allocation25 [shape = 'u8[1024]{0}', space=vmem, size = 0x400, scoped, tag = 'input window, operand 16, single buffered']
    #allocation26 [shape = 'u8[512]{0}', space=vmem, size = 0x400, scoped, tag = 'input window, operand 18, single buffered']
    #allocation27 [shape = 's32[1]{0}', space=sflag, size = 0x4, scoped, tag = 'scoped memory for tpu_custom_call.1']
    #allocation28 [shape = 'u8[16384]{0}', space=vmem, size = 0x4000, scoped, tag = 'input window, operand 21, single buffered']
    #allocation29 [shape = 'u8[8192]{0}', space=vmem, size = 0x2000, scoped, tag = 'output window, operand 0']
    %29 = vsyncpa [#allocation3], 0
    %s30 = scalar_lea.sflag [#allocation3], 1
    %31 = vsyncpa %s30, 0
    %32 = vsyncpa [#allocation6], 0
    %33 = vsyncpa [#allocation9], 0
    %34 = vsyncpa [#allocation12], 0
    %35 = vsyncpa [#allocation15], 0
    %36 = vsyncpa [#allocation18], 0
    %37 = vsyncpa [#allocation21], 0
    %38 = vsyncpa [#allocation24], 0
    %39 = vsyncpa [#allocation27], 0
    %40 = vsyncpa [#allocation4], 0
    %s41 = scalar_lea.sflag [#allocation4], 1
    %42 = vsyncpa %s41, 0
    loop: start=0, step=1, limit=4
    $region2: #{tpu_custom_call.1} parent=1 // loop_pre_header
      _
    $region3: #{tpu_custom_call.1} parent=1 // loop_header
      %s44 = sphi 0, %s48
      %p45 = scmp.ge.s32.totalorder %s44, 4
      %s54 = sphi 0, %s56
      %s57 = sphi 0, %s54
      %s58 = sphi 0, %s57
      %s74 = sphi 0, %s58
      %s78 = sphi 0, %s78
      %s80 = sphi 0, %s78
      %s81 = sphi 0, %s80
      %s95 = sphi 0, %s81
      %s99 = sphi 0, %s99
      %s101 = sphi 0, %s99
      %s102 = sphi 0, %s101
      %s116 = sphi 0, %s102
      %s120 = sphi 0, %s120
      %s122 = sphi 0, %s120
      %s123 = sphi 0, %s122
      %s137 = sphi 0, %s123
      %s141 = sphi 0, %s141
      %s143 = sphi 0, %s141
      %s144 = sphi 0, %s143
      %s158 = sphi 0, %s144
      %s162 = sphi 0, %s162
      %s164 = sphi 0, %s162
      %s165 = sphi 0, %s164
      %s179 = sphi 0, %s165
      %s183 = sphi 0, %s183
      %s185 = sphi 0, %s183
      %s186 = sphi 0, %s185
      %s200 = sphi 0, %s186
      %s204 = sphi 0, %s204
      %s206 = sphi 0, %s204
      %s207 = sphi 0, %s206
      %s221 = sphi 0, %s207
      %s225 = sphi 0, %s225
      %s227 = sphi 0, %s225
      %s228 = sphi 0, %s227
      %s242 = sphi 0, %s228
      %s246 = sphi 0, %s246
      %s248 = sphi 0, %s246
      %s249 = sphi 0, %s248
      %s263 = sphi 0, %s249
      %s267 = sphi 0, %s267
      %s269 = sphi 0, %s267
      %s270 = sphi 0, %s269
      %s284 = sphi 0, %s270
      %s288 = sphi 0, %s288
      %s290 = sphi 0, %s288
      %s291 = sphi 0, %s290
      %s305 = sphi 0, %s291
      %s309 = sphi 0, %s309
      %s311 = sphi 0, %s309
      %s312 = sphi 0, %s311
      %s326 = sphi 0, %s312
      %s330 = sphi 0, %s330
      %s332 = sphi 0, %s330
      %s333 = sphi 0, %s332
      %s347 = sphi 0, %s333
      %s351 = sphi 0, %s351
      %s353 = sphi 0, %s351
      %s354 = sphi 0, %s353
      %s368 = sphi 0, %s354
      %s372 = sphi 0, %s372
      %s374 = sphi 0, %s372
      %s375 = sphi 0, %s374
      %s389 = sphi 0, %s375
      %s393 = sphi 0, %s393
      %s395 = sphi 0, %s393
      %s396 = sphi 0, %s395
      %s410 = sphi 0, %s396
      %s414 = sphi 0, %s414
      %s416 = sphi 0, %s414
      %s417 = sphi 0, %s416
      %s431 = sphi 0, %s417
      %s435 = sphi 0, %s435
      %s437 = sphi 0, %s435
      %s438 = sphi 0, %s437
      %s452 = sphi 0, %s438
      %s456 = sphi 0, %s456
      %s458 = sphi 0, %s456
      %s459 = sphi 0, %s458
      %s473 = sphi 0, %s459
      %s477 = sphi 0, %s477
      %s479 = sphi 0, %s477
      %s480 = sphi 0, %s479
      %s494 = sphi 0, %s480
      %s498 = sphi 0, %s498
      %s500 = sphi 0, %s498
      %s501 = sphi 0, %s500
      %s515 = sphi 0, %s501
      %s519 = sphi 0, %s519
      %s521 = sphi 0, %s519
      %s522 = sphi 0, %s521
      %s536 = sphi 0, %s522
      %s540 = sphi 0, %s540
      %s542 = sphi 0, %s540
      %s543 = sphi 0, %s542
      %s557 = sphi 0, %s543
      %s563 = sphi 0, %s565
      %s566 = sphi 0, %s563
      %s567 = sphi 0, %s566
      %s583 = sphi 0, %s567
    $region4: #{tpu_custom_call.1} parent=1 // loop_header_branch
      %47 = sbr.rel (%p45) target = $region8
    $region5: #{tpu_custom_call.1} parent=1 // loop_body
      %s49 = ssub.s32 %s44, 1
      %s50 = ssub.s32 %s44, 2
      %s51 = sadd.s32 %s44, 1
      %s52 = ssub.s32 %s44, %s51
      %p53 = scmp.eq.s32.totalorder %s52, 0
      %s55 = sadd.s32 %s54, 1
      %s56 = scalar_select %p53, %s54, %s55
      %p59 = pneg %p53
      %p60 = scmp.eq.s32.totalorder %s44, 1
      %p61 = por %p59, %p60
      %p62 = scmp.ne.s32.totalorder %s54, %s57
      %p63 = scmp.eq.s32.totalorder %s44, 0
      %p64 = por %p62, %p63
      %p65 = scmp.ne.s32.totalorder %s54, %s57
      %p66 = scmp.eq.s32.totalorder %s49, 1
      %p67 = por %p65, %p66
      %p68 = scmp.ne.s32.totalorder %s57, %s58
      %p69 = scmp.eq.s32.totalorder %s49, 0
      %p70 = por %p68, %p69
      %p71 = scmp.ne.s32.totalorder %s57, %s58
      %p72 = scmp.eq.s32.totalorder %s50, 1
      %p73 = por %p71, %p72
      %p75 = scmp.ne.s32.totalorder %s58, %s74
      %p76 = scmp.eq.s32.totalorder %s50, 0
      %p77 = por %p75, %p76
      %s79 = sadd.s32 %s78, 1
      %p82 = scmp.eq.s32.totalorder %s44, 1
      %p83 = scmp.ne.s32.totalorder %s78, %s80
      %p84 = scmp.eq.s32.totalorder %s44, 0
      %p85 = por %p83, %p84
      %p86 = scmp.ne.s32.totalorder %s78, %s80
      %p87 = scmp.eq.s32.totalorder %s49, 1
      %p88 = por %p86, %p87
      %p89 = scmp.ne.s32.totalorder %s80, %s81
      %p90 = scmp.eq.s32.totalorder %s49, 0
      %p91 = por %p89, %p90
      %p92 = scmp.ne.s32.totalorder %s80, %s81
      %p93 = scmp.eq.s32.totalorder %s50, 1
      %p94 = por %p92, %p93
      %p96 = scmp.ne.s32.totalorder %s81, %s95
      %p97 = scmp.eq.s32.totalorder %s50, 0
      %p98 = por %p96, %p97
      %s100 = sadd.s32 %s99, 1
      %p103 = scmp.eq.s32.totalorder %s44, 1
      %p104 = scmp.ne.s32.totalorder %s99, %s101
      %p105 = scmp.eq.s32.totalorder %s44, 0
      %p106 = por %p104, %p105
      %p107 = scmp.ne.s32.totalorder %s99, %s101
      %p108 = scmp.eq.s32.totalorder %s49, 1
      %p109 = por %p107, %p108
      %p110 = scmp.ne.s32.totalorder %s101, %s102
      %p111 = scmp.eq.s32.totalorder %s49, 0
      %p112 = por %p110, %p111
      %p113 = scmp.ne.s32.totalorder %s101, %s102
      %p114 = scmp.eq.s32.totalorder %s50, 1
      %p115 = por %p113, %p114
      %p117 = scmp.ne.s32.totalorder %s102, %s116
      %p118 = scmp.eq.s32.totalorder %s50, 0
      %p119 = por %p117, %p118
      %s121 = sadd.s32 %s120, 1
      %p124 = scmp.eq.s32.totalorder %s44, 1
      %p125 = scmp.ne.s32.totalorder %s120, %s122
      %p126 = scmp.eq.s32.totalorder %s44, 0
      %p127 = por %p125, %p126
      %p128 = scmp.ne.s32.totalorder %s120, %s122
      %p129 = scmp.eq.s32.totalorder %s49, 1
      %p130 = por %p128, %p129
      %p131 = scmp.ne.s32.totalorder %s122, %s123
      %p132 = scmp.eq.s32.totalorder %s49, 0
      %p133 = por %p131, %p132
      %p134 = scmp.ne.s32.totalorder %s122, %s123
      %p135 = scmp.eq.s32.totalorder %s50, 1
      %p136 = por %p134, %p135
      %p138 = scmp.ne.s32.totalorder %s123, %s137
      %p139 = scmp.eq.s32.totalorder %s50, 0
      %p140 = por %p138, %p139
      %s142 = sadd.s32 %s141, 1
      %p145 = scmp.eq.s32.totalorder %s44, 1
      %p146 = scmp.ne.s32.totalorder %s141, %s143
      %p147 = scmp.eq.s32.totalorder %s44, 0
      %p148 = por %p146, %p147
      %p149 = scmp.ne.s32.totalorder %s141, %s143
      %p150 = scmp.eq.s32.totalorder %s49, 1
      %p151 = por %p149, %p150
      %p152 = scmp.ne.s32.totalorder %s143, %s144
      %p153 = scmp.eq.s32.totalorder %s49, 0
      %p154 = por %p152, %p153
      %p155 = scmp.ne.s32.totalorder %s143, %s144
      %p156 = scmp.eq.s32.totalorder %s50, 1
      %p157 = por %p155, %p156
      %p159 = scmp.ne.s32.totalorder %s144, %s158
      %p160 = scmp.eq.s32.totalorder %s50, 0
      %p161 = por %p159, %p160
      %s163 = sadd.s32 %s162, 1
      %p166 = scmp.eq.s32.totalorder %s44, 1
      %p167 = scmp.ne.s32.totalorder %s162, %s164
      %p168 = scmp.eq.s32.totalorder %s44, 0
      %p169 = por %p167, %p168
      %p170 = scmp.ne.s32.totalorder %s162, %s164
      %p171 = scmp.eq.s32.totalorder %s49, 1
      %p172 = por %p170, %p171
      %p173 = scmp.ne.s32.totalorder %s164, %s165
      %p174 = scmp.eq.s32.totalorder %s49, 0
      %p175 = por %p173, %p174
      %p176 = scmp.ne.s32.totalorder %s164, %s165
      %p177 = scmp.eq.s32.totalorder %s50, 1
      %p178 = por %p176, %p177
      %p180 = scmp.ne.s32.totalorder %s165, %s179
      %p181 = scmp.eq.s32.totalorder %s50, 0
      %p182 = por %p180, %p181
      %s184 = sadd.s32 %s183, 1
      %p187 = scmp.eq.s32.totalorder %s44, 1
      %p188 = scmp.ne.s32.totalorder %s183, %s185
      %p189 = scmp.eq.s32.totalorder %s44, 0
      %p190 = por %p188, %p189
      %p191 = scmp.ne.s32.totalorder %s183, %s185
      %p192 = scmp.eq.s32.totalorder %s49, 1
      %p193 = por %p191, %p192
      %p194 = scmp.ne.s32.totalorder %s185, %s186
      %p195 = scmp.eq.s32.totalorder %s49, 0
      %p196 = por %p194, %p195
      %p197 = scmp.ne.s32.totalorder %s185, %s186
      %p198 = scmp.eq.s32.totalorder %s50, 1
      %p199 = por %p197, %p198
      %p201 = scmp.ne.s32.totalorder %s186, %s200
      %p202 = scmp.eq.s32.totalorder %s50, 0
      %p203 = por %p201, %p202
      %s205 = sadd.s32 %s204, 1
      %p208 = scmp.eq.s32.totalorder %s44, 1
      %p209 = scmp.ne.s32.totalorder %s204, %s206
      %p210 = scmp.eq.s32.totalorder %s44, 0
      %p211 = por %p209, %p210
      %p212 = scmp.ne.s32.totalorder %s204, %s206
      %p213 = scmp.eq.s32.totalorder %s49, 1
      %p214 = por %p212, %p213
      %p215 = scmp.ne.s32.totalorder %s206, %s207
      %p216 = scmp.eq.s32.totalorder %s49, 0
      %p217 = por %p215, %p216
      %p218 = scmp.ne.s32.totalorder %s206, %s207
      %p219 = scmp.eq.s32.totalorder %s50, 1
      %p220 = por %p218, %p219
      %p222 = scmp.ne.s32.totalorder %s207, %s221
      %p223 = scmp.eq.s32.totalorder %s50, 0
      %p224 = por %p222, %p223
      %s226 = sadd.s32 %s225, 1
      %p229 = scmp.eq.s32.totalorder %s44, 1
      %p230 = scmp.ne.s32.totalorder %s225, %s227
      %p231 = scmp.eq.s32.totalorder %s44, 0
      %p232 = por %p230, %p231
      %p233 = scmp.ne.s32.totalorder %s225, %s227
      %p234 = scmp.eq.s32.totalorder %s49, 1
      %p235 = por %p233, %p234
      %p236 = scmp.ne.s32.totalorder %s227, %s228
      %p237 = scmp.eq.s32.totalorder %s49, 0
      %p238 = por %p236, %p237
      %p239 = scmp.ne.s32.totalorder %s227, %s228
      %p240 = scmp.eq.s32.totalorder %s50, 1
      %p241 = por %p239, %p240
      %p243 = scmp.ne.s32.totalorder %s228, %s242
      %p244 = scmp.eq.s32.totalorder %s50, 0
      %p245 = por %p243, %p244
      %s247 = sadd.s32 %s246, 1
      %p250 = scmp.eq.s32.totalorder %s44, 1
      %p251 = scmp.ne.s32.totalorder %s246, %s248
      %p252 = scmp.eq.s32.totalorder %s44, 0
      %p253 = por %p251, %p252
      %p254 = scmp.ne.s32.totalorder %s246, %s248
      %p255 = scmp.eq.s32.totalorder %s49, 1
      %p256 = por %p254, %p255
      %p257 = scmp.ne.s32.totalorder %s248, %s249
      %p258 = scmp.eq.s32.totalorder %s49, 0
      %p259 = por %p257, %p258
      %p260 = scmp.ne.s32.totalorder %s248, %s249
      %p261 = scmp.eq.s32.totalorder %s50, 1
      %p262 = por %p260, %p261
      %p264 = scmp.ne.s32.totalorder %s249, %s263
      %p265 = scmp.eq.s32.totalorder %s50, 0
      %p266 = por %p264, %p265
      %s268 = sadd.s32 %s267, 1
      %p271 = scmp.eq.s32.totalorder %s44, 1
      %p272 = scmp.ne.s32.totalorder %s267, %s269
      %p273 = scmp.eq.s32.totalorder %s44, 0
      %p274 = por %p272, %p273
      %p275 = scmp.ne.s32.totalorder %s267, %s269
      %p276 = scmp.eq.s32.totalorder %s49, 1
      %p277 = por %p275, %p276
      %p278 = scmp.ne.s32.totalorder %s269, %s270
      %p279 = scmp.eq.s32.totalorder %s49, 0
      %p280 = por %p278, %p279
      %p281 = scmp.ne.s32.totalorder %s269, %s270
      %p282 = scmp.eq.s32.totalorder %s50, 1
      %p283 = por %p281, %p282
      %p285 = scmp.ne.s32.totalorder %s270, %s284
      %p286 = scmp.eq.s32.totalorder %s50, 0
      %p287 = por %p285, %p286
      %s289 = sadd.s32 %s288, 1
      %p292 = scmp.eq.s32.totalorder %s44, 1
      %p293 = scmp.ne.s32.totalorder %s288, %s290
      %p294 = scmp.eq.s32.totalorder %s44, 0
      %p295 = por %p293, %p294
      %p296 = scmp.ne.s32.totalorder %s288, %s290
      %p297 = scmp.eq.s32.totalorder %s49, 1
      %p298 = por %p296, %p297
      %p299 = scmp.ne.s32.totalorder %s290, %s291
      %p300 = scmp.eq.s32.totalorder %s49, 0
      %p301 = por %p299, %p300
      %p302 = scmp.ne.s32.totalorder %s290, %s291
      %p303 = scmp.eq.s32.totalorder %s50, 1
      %p304 = por %p302, %p303
      %p306 = scmp.ne.s32.totalorder %s291, %s305
      %p307 = scmp.eq.s32.totalorder %s50, 0
      %p308 = por %p306, %p307
      %s310 = sadd.s32 %s309, 1
      %p313 = scmp.eq.s32.totalorder %s44, 1
      %p314 = scmp.ne.s32.totalorder %s309, %s311
      %p315 = scmp.eq.s32.totalorder %s44, 0
      %p316 = por %p314, %p315
      %p317 = scmp.ne.s32.totalorder %s309, %s311
      %p318 = scmp.eq.s32.totalorder %s49, 1
      %p319 = por %p317, %p318
      %p320 = scmp.ne.s32.totalorder %s311, %s312
      %p321 = scmp.eq.s32.totalorder %s49, 0
      %p322 = por %p320, %p321
      %p323 = scmp.ne.s32.totalorder %s311, %s312
      %p324 = scmp.eq.s32.totalorder %s50, 1
      %p325 = por %p323, %p324
      %p327 = scmp.ne.s32.totalorder %s312, %s326
      %p328 = scmp.eq.s32.totalorder %s50, 0
      %p329 = por %p327, %p328
      %s331 = sadd.s32 %s330, 1
      %p334 = scmp.eq.s32.totalorder %s44, 1
      %p335 = scmp.ne.s32.totalorder %s330, %s332
      %p336 = scmp.eq.s32.totalorder %s44, 0
      %p337 = por %p335, %p336
      %p338 = scmp.ne.s32.totalorder %s330, %s332
      %p339 = scmp.eq.s32.totalorder %s49, 1
      %p340 = por %p338, %p339
      %p341 = scmp.ne.s32.totalorder %s332, %s333
      %p342 = scmp.eq.s32.totalorder %s49, 0
      %p343 = por %p341, %p342
      %p344 = scmp.ne.s32.totalorder %s332, %s333
      %p345 = scmp.eq.s32.totalorder %s50, 1
      %p346 = por %p344, %p345
      %p348 = scmp.ne.s32.totalorder %s333, %s347
      %p349 = scmp.eq.s32.totalorder %s50, 0
      %p350 = por %p348, %p349
      %s352 = sadd.s32 %s351, 1
      %p355 = scmp.eq.s32.totalorder %s44, 1
      %p356 = scmp.ne.s32.totalorder %s351, %s353
      %p357 = scmp.eq.s32.totalorder %s44, 0
      %p358 = por %p356, %p357
      %p359 = scmp.ne.s32.totalorder %s351, %s353
      %p360 = scmp.eq.s32.totalorder %s49, 1
      %p361 = por %p359, %p360
      %p362 = scmp.ne.s32.totalorder %s353, %s354
      %p363 = scmp.eq.s32.totalorder %s49, 0
      %p364 = por %p362, %p363
      %p365 = scmp.ne.s32.totalorder %s353, %s354
      %p366 = scmp.eq.s32.totalorder %s50, 1
      %p367 = por %p365, %p366
      %p369 = scmp.ne.s32.totalorder %s354, %s368
      %p370 = scmp.eq.s32.totalorder %s50, 0
      %p371 = por %p369, %p370
      %s373 = sadd.s32 %s372, 1
      %p376 = scmp.eq.s32.totalorder %s44, 1
      %p377 = scmp.ne.s32.totalorder %s372, %s374
      %p378 = scmp.eq.s32.totalorder %s44, 0
      %p379 = por %p377, %p378
      %p380 = scmp.ne.s32.totalorder %s372, %s374
      %p381 = scmp.eq.s32.totalorder %s49, 1
      %p382 = por %p380, %p381
      %p383 = scmp.ne.s32.totalorder %s374, %s375
      %p384 = scmp.eq.s32.totalorder %s49, 0
      %p385 = por %p383, %p384
      %p386 = scmp.ne.s32.totalorder %s374, %s375
      %p387 = scmp.eq.s32.totalorder %s50, 1
      %p388 = por %p386, %p387
      %p390 = scmp.ne.s32.totalorder %s375, %s389
      %p391 = scmp.eq.s32.totalorder %s50, 0
      %p392 = por %p390, %p391
      %s394 = sadd.s32 %s393, 1
      %p397 = scmp.eq.s32.totalorder %s44, 1
      %p398 = scmp.ne.s32.totalorder %s393, %s395
      %p399 = scmp.eq.s32.totalorder %s44, 0
      %p400 = por %p398, %p399
      %p401 = scmp.ne.s32.totalorder %s393, %s395
      %p402 = scmp.eq.s32.totalorder %s49, 1
      %p403 = por %p401, %p402
      %p404 = scmp.ne.s32.totalorder %s395, %s396
      %p405 = scmp.eq.s32.totalorder %s49, 0
      %p406 = por %p404, %p405
      %p407 = scmp.ne.s32.totalorder %s395, %s396
      %p408 = scmp.eq.s32.totalorder %s50, 1
      %p409 = por %p407, %p408
      %p411 = scmp.ne.s32.totalorder %s396, %s410
      %p412 = scmp.eq.s32.totalorder %s50, 0
      %p413 = por %p411, %p412
      %s415 = sadd.s32 %s414, 1
      %p418 = scmp.eq.s32.totalorder %s44, 1
      %p419 = scmp.ne.s32.totalorder %s414, %s416
      %p420 = scmp.eq.s32.totalorder %s44, 0
      %p421 = por %p419, %p420
      %p422 = scmp.ne.s32.totalorder %s414, %s416
      %p423 = scmp.eq.s32.totalorder %s49, 1
      %p424 = por %p422, %p423
      %p425 = scmp.ne.s32.totalorder %s416, %s417
      %p426 = scmp.eq.s32.totalorder %s49, 0
      %p427 = por %p425, %p426
      %p428 = scmp.ne.s32.totalorder %s416, %s417
      %p429 = scmp.eq.s32.totalorder %s50, 1
      %p430 = por %p428, %p429
      %p432 = scmp.ne.s32.totalorder %s417, %s431
      %p433 = scmp.eq.s32.totalorder %s50, 0
      %p434 = por %p432, %p433
      %s436 = sadd.s32 %s435, 1
      %p439 = scmp.eq.s32.totalorder %s44, 1
      %p440 = scmp.ne.s32.totalorder %s435, %s437
      %p441 = scmp.eq.s32.totalorder %s44, 0
      %p442 = por %p440, %p441
      %p443 = scmp.ne.s32.totalorder %s435, %s437
      %p444 = scmp.eq.s32.totalorder %s49, 1
      %p445 = por %p443, %p444
      %p446 = scmp.ne.s32.totalorder %s437, %s438
      %p447 = scmp.eq.s32.totalorder %s49, 0
      %p448 = por %p446, %p447
      %p449 = scmp.ne.s32.totalorder %s437, %s438
      %p450 = scmp.eq.s32.totalorder %s50, 1
      %p451 = por %p449, %p450
      %p453 = scmp.ne.s32.totalorder %s438, %s452
      %p454 = scmp.eq.s32.totalorder %s50, 0
      %p455 = por %p453, %p454
      %s457 = sadd.s32 %s456, 1
      %p460 = scmp.eq.s32.totalorder %s44, 1
      %p461 = scmp.ne.s32.totalorder %s456, %s458
      %p462 = scmp.eq.s32.totalorder %s44, 0
      %p463 = por %p461, %p462
      %p464 = scmp.ne.s32.totalorder %s456, %s458
      %p465 = scmp.eq.s32.totalorder %s49, 1
      %p466 = por %p464, %p465
      %p467 = scmp.ne.s32.totalorder %s458, %s459
      %p468 = scmp.eq.s32.totalorder %s49, 0
      %p469 = por %p467, %p468
      %p470 = scmp.ne.s32.totalorder %s458, %s459
      %p471 = scmp.eq.s32.totalorder %s50, 1
      %p472 = por %p470, %p471
      %p474 = scmp.ne.s32.totalorder %s459, %s473
      %p475 = scmp.eq.s32.totalorder %s50, 0
      %p476 = por %p474, %p475
      %s478 = sadd.s32 %s477, 1
      %p481 = scmp.eq.s32.totalorder %s44, 1
      %p482 = scmp.ne.s32.totalorder %s477, %s479
      %p483 = scmp.eq.s32.totalorder %s44, 0
      %p484 = por %p482, %p483
      %p485 = scmp.ne.s32.totalorder %s477, %s479
      %p486 = scmp.eq.s32.totalorder %s49, 1
      %p487 = por %p485, %p486
      %p488 = scmp.ne.s32.totalorder %s479, %s480
      %p489 = scmp.eq.s32.totalorder %s49, 0
      %p490 = por %p488, %p489
      %p491 = scmp.ne.s32.totalorder %s479, %s480
      %p492 = scmp.eq.s32.totalorder %s50, 1
      %p493 = por %p491, %p492
      %p495 = scmp.ne.s32.totalorder %s480, %s494
      %p496 = scmp.eq.s32.totalorder %s50, 0
      %p497 = por %p495, %p496
      %s499 = sadd.s32 %s498, 1
      %p502 = scmp.eq.s32.totalorder %s44, 1
      %p503 = scmp.ne.s32.totalorder %s498, %s500
      %p504 = scmp.eq.s32.totalorder %s44, 0
      %p505 = por %p503, %p504
      %p506 = scmp.ne.s32.totalorder %s498, %s500
      %p507 = scmp.eq.s32.totalorder %s49, 1
      %p508 = por %p506, %p507
      %p509 = scmp.ne.s32.totalorder %s500, %s501
      %p510 = scmp.eq.s32.totalorder %s49, 0
      %p511 = por %p509, %p510
      %p512 = scmp.ne.s32.totalorder %s500, %s501
      %p513 = scmp.eq.s32.totalorder %s50, 1
      %p514 = por %p512, %p513
      %p516 = scmp.ne.s32.totalorder %s501, %s515
      %p517 = scmp.eq.s32.totalorder %s50, 0
      %p518 = por %p516, %p517
      %s520 = sadd.s32 %s519, 1
      %p523 = scmp.eq.s32.totalorder %s44, 1
      %p524 = scmp.ne.s32.totalorder %s519, %s521
      %p525 = scmp.eq.s32.totalorder %s44, 0
      %p526 = por %p524, %p525
      %p527 = scmp.ne.s32.totalorder %s519, %s521
      %p528 = scmp.eq.s32.totalorder %s49, 1
      %p529 = por %p527, %p528
      %p530 = scmp.ne.s32.totalorder %s521, %s522
      %p531 = scmp.eq.s32.totalorder %s49, 0
      %p532 = por %p530, %p531
      %p533 = scmp.ne.s32.totalorder %s521, %s522
      %p534 = scmp.eq.s32.totalorder %s50, 1
      %p535 = por %p533, %p534
      %p537 = scmp.ne.s32.totalorder %s522, %s536
      %p538 = scmp.eq.s32.totalorder %s50, 0
      %p539 = por %p537, %p538
      %s541 = sadd.s32 %s540, 1
      %p544 = scmp.eq.s32.totalorder %s44, 1
      %p545 = scmp.ne.s32.totalorder %s540, %s542
      %p546 = scmp.eq.s32.totalorder %s44, 0
      %p547 = por %p545, %p546
      %p548 = scmp.ne.s32.totalorder %s540, %s542
      %p549 = scmp.eq.s32.totalorder %s49, 1
      %p550 = por %p548, %p549
      %p551 = scmp.ne.s32.totalorder %s542, %s543
      %p552 = scmp.eq.s32.totalorder %s49, 0
      %p553 = por %p551, %p552
      %p554 = scmp.ne.s32.totalorder %s542, %s543
      %p555 = scmp.eq.s32.totalorder %s50, 1
      %p556 = por %p554, %p555
      %p558 = scmp.ne.s32.totalorder %s543, %s557
      %p559 = scmp.eq.s32.totalorder %s50, 0
      %p560 = por %p558, %p559
      %s561 = ssub.s32 %s44, %s51
      %p562 = scmp.eq.s32.totalorder %s561, 0
      %s564 = sadd.s32 %s563, 1
      %s565 = scalar_select %p562, %s563, %s564
      %p568 = pneg %p562
      %p569 = scmp.eq.s32.totalorder %s44, 1
      %p570 = por %p568, %p569
      %p571 = scmp.ne.s32.totalorder %s563, %s566
      %p572 = scmp.eq.s32.totalorder %s44, 0
      %p573 = por %p571, %p572
      %p574 = scmp.ne.s32.totalorder %s563, %s566
      %p575 = scmp.eq.s32.totalorder %s49, 1
      %p576 = por %p574, %p575
      %p577 = scmp.ne.s32.totalorder %s566, %s567
      %p578 = scmp.eq.s32.totalorder %s49, 0
      %p579 = por %p577, %p578
      %p580 = scmp.ne.s32.totalorder %s566, %s567
      %p581 = scmp.eq.s32.totalorder %s50, 1
      %p582 = por %p580, %p581
      %p584 = scmp.ne.s32.totalorder %s567, %s583
      %p585 = scmp.eq.s32.totalorder %s50, 0
      %p586 = por %p584, %p585
      %p587 = scmp.le.s32.totalorder 1, %s44
      %p588 = scmp.lt.s32.totalorder %s44, 3
      %p589 = pnand %p587, %p588
      %p590 = pneg %p589
      // Predicated region
      $region9: #{tpu_custom_call.1} parent=5 // pred_check
        _
      $region10: #{tpu_custom_call.1} parent=5 // pred_check_branch
        %592 = sbr.rel (%p589) target = $region12
      $region11: #{tpu_custom_call.1} parent=5 // pred_region
        %s593 = ssub.s32 %s44, 1
        // Predicated region
        $region13: #{tpu_custom_call.1} parent=11 // pred_check
          %p594 = pneg %p91
        $region14: #{tpu_custom_call.1} parent=11 // pred_check_branch
          %596 = sbr.rel (%p594) target = $region16
        $region15: #{tpu_custom_call.1} parent=11 // pred_region
          %s598 = ssub.s32 256, 256
          %599 = vsyncadd [#allocation6], %s598
          %s600 = sshll.u32 [#allocation5], 4
          %s601 = int_to_ptr.vmem [resolvable:$true] %s600
          %606 = dma.hbm_to_vmem [thread:$0]  %s1, 256, %s601, [#allocation6], 64, 64, 4
        $region16: #{tpu_custom_call.1} parent=11 // pred_fallthru
          _
        // Predicated region
        $region17: #{tpu_custom_call.1} parent=11 // pred_check
          %p607 = pneg %p112
        $region18: #{tpu_custom_call.1} parent=11 // pred_check_branch
          %609 = sbr.rel (%p607) target = $region20
        $region19: #{tpu_custom_call.1} parent=11 // pred_region
          %s611 = ssub.s32 16, 16
          %612 = vsyncadd [#allocation6], %s611
          %s614 = sshll.u32 [#allocation7], 4
          %s615 = int_to_ptr.vmem [resolvable:$true] %s614
          %617 = dma.hbm_to_vmem [thread:$0]  %s2, 16, %s615, [#allocation6]
        $region20: #{tpu_custom_call.1} parent=11 // pred_fallthru
          _
        // Predicated region
        $region21: #{tpu_custom_call.1} parent=11 // pred_check
          %p618 = pneg %p133
        $region22: #{tpu_custom_call.1} parent=11 // pred_check_branch
          %620 = sbr.rel (%p618) target = $region24
        $region23: #{tpu_custom_call.1} parent=11 // pred_region
          _
        $region24: #{tpu_custom_call.1} parent=11 // pred_fallthru
          _
        // Predicated region
        $region25: #{tpu_custom_call.1} parent=11 // pred_check
          %p621 = pneg %p154
        $region26: #{tpu_custom_call.1} parent=11 // pred_check_branch
          %623 = sbr.rel (%p621) target = $region28
        $region27: #{tpu_custom_call.1} parent=11 // pred_region
          %s625 = ssub.s32 16, 16
          %626 = vsyncadd [#allocation9], %s625
          %s628 = sshll.u32 [#allocation8], 4
          %s629 = int_to_ptr.vmem [resolvable:$true] %s628
          %631 = dma.hbm_to_vmem [thread:$0]  %s4, 16, %s629, [#allocation9]
        $region28: #{tpu_custom_call.1} parent=11 // pred_fallthru
          _
        // Predicated region
        $region29: #{tpu_custom_call.1} parent=11 // pred_check
          %p632 = pneg %p175
        $region30: #{tpu_custom_call.1} parent=11 // pred_check_branch
          %634 = sbr.rel (%p632) target = $region32
        $region31: #{tpu_custom_call.1} parent=11 // pred_region
          %s636 = ssub.s32 256, 256
          %637 = vsyncadd [#allocation9], %s636
          %s638 = sshll.u32 [#allocation10], 4
          %s639 = int_to_ptr.vmem [resolvable:$true] %s638
          %644 = dma.hbm_to_vmem [thread:$0]  %s5, 256, %s639, [#allocation9], 64, 64, 4
        $region32: #{tpu_custom_call.1} parent=11 // pred_fallthru
          _
        // Predicated region
        $region33: #{tpu_custom_call.1} parent=11 // pred_check
          %p645 = pneg %p196
        $region34: #{tpu_custom_call.1} parent=11 // pred_check_branch
          %647 = sbr.rel (%p645) target = $region36
        $region35: #{tpu_custom_call.1} parent=11 // pred_region
          %s649 = ssub.s32 16, 16
          %650 = vsyncadd [#allocation12], %s649
          %s652 = sshll.u32 [#allocation11], 4
          %s653 = int_to_ptr.vmem [resolvable:$true] %s652
          %655 = dma.hbm_to_vmem [thread:$0]  %s6, 16, %s653, [#allocation12]
        $region36: #{tpu_custom_call.1} parent=11 // pred_fallthru
          _
        // Predicated region
        $region37: #{tpu_custom_call.1} parent=11 // pred_check
          %p656 = pneg %p217
        $region38: #{tpu_custom_call.1} parent=11 // pred_check_branch
          %658 = sbr.rel (%p656) target = $region40
        $region39: #{tpu_custom_call.1} parent=11 // pred_region
          %s660 = ssub.s32 256, 256
          %661 = vsyncadd [#allocation12], %s660
          %s662 = sshll.u32 [#allocation13], 4
          %s663 = int_to_ptr.vmem [resolvable:$true] %s662
          %668 = dma.hbm_to_vmem [thread:$0]  %s7, 256, %s663, [#allocation12], 64, 64, 4
        $region40: #{tpu_custom_call.1} parent=11 // pred_fallthru
          _
        // Predicated region
        $region41: #{tpu_custom_call.1} parent=11 // pred_check
          %p669 = pneg %p238
        $region42: #{tpu_custom_call.1} parent=11 // pred_check_branch
          %671 = sbr.rel (%p669) target = $region44
        $region43: #{tpu_custom_call.1} parent=11 // pred_region
          %s673 = ssub.s32 16, 16
          %674 = vsyncadd [#allocation15], %s673
          %s676 = sshll.u32 [#allocation14], 4
          %s677 = int_to_ptr.vmem [resolvable:$true] %s676
          %679 = dma.hbm_to_vmem [thread:$0]  %s8, 16, %s677, [#allocation15]
        $region44: #{tpu_custom_call.1} parent=11 // pred_fallthru
          _
        // Predicated region
        $region45: #{tpu_custom_call.1} parent=11 // pred_check
          %p680 = pneg %p259
        $region46: #{tpu_custom_call.1} parent=11 // pred_check_branch
          %682 = sbr.rel (%p680) target = $region48
        $region47: #{tpu_custom_call.1} parent=11 // pred_region
          _
        $region48: #{tpu_custom_call.1} parent=11 // pred_fallthru
          _
        // Predicated region
        $region49: #{tpu_custom_call.1} parent=11 // pred_check
          %p683 = pneg %p280
        $region50: #{tpu_custom_call.1} parent=11 // pred_check_branch
          %685 = sbr.rel (%p683) target = $region52
        $region51: #{tpu_custom_call.1} parent=11 // pred_region
          %s687 = ssub.s32 16, 16
          %688 = vsyncadd [#allocation15], %s687
          %s690 = sshll.u32 [#allocation16], 4
          %s691 = int_to_ptr.vmem [resolvable:$true] %s690
          %693 = dma.hbm_to_vmem [thread:$0]  %s10, 16, %s691, [#allocation15]
        $region52: #{tpu_custom_call.1} parent=11 // pred_fallthru
          _
        // Predicated region
        $region53: #{tpu_custom_call.1} parent=11 // pred_check
          %p694 = pneg %p301
        $region54: #{tpu_custom_call.1} parent=11 // pred_check_branch
          %696 = sbr.rel (%p694) target = $region56
        $region55: #{tpu_custom_call.1} parent=11 // pred_region
          %s698 = ssub.s32 512, 512
          %699 = vsyncadd [#allocation18], %s698
          %s700 = sshll.u32 [#allocation17], 4
          %s701 = int_to_ptr.vmem [resolvable:$true] %s700
          %706 = dma.hbm_to_vmem [thread:$0]  %s11, 512, %s701, [#allocation18], 128, 128, 8
        $region56: #{tpu_custom_call.1} parent=11 // pred_fallthru
          _
        // Predicated region
        $region57: #{tpu_custom_call.1} parent=11 // pred_check
          %p707 = pneg %p322
        $region58: #{tpu_custom_call.1} parent=11 // pred_check_branch
          %709 = sbr.rel (%p707) target = $region60
        $region59: #{tpu_custom_call.1} parent=11 // pred_region
          %s711 = ssub.s32 512, 512
          %712 = vsyncadd [#allocation18], %s711
          %s713 = sshll.u32 [#allocation19], 4
          %s714 = int_to_ptr.vmem [resolvable:$true] %s713
          %719 = dma.hbm_to_vmem [thread:$0]  %s12, 512, %s714, [#allocation18], 128, 128, 8
        $region60: #{tpu_custom_call.1} parent=11 // pred_fallthru
          _
        // Predicated region
        $region61: #{tpu_custom_call.1} parent=11 // pred_check
          %p720 = pneg %p343
        $region62: #{tpu_custom_call.1} parent=11 // pred_check_branch
          %722 = sbr.rel (%p720) target = $region64
        $region63: #{tpu_custom_call.1} parent=11 // pred_region
          %s724 = ssub.s32 32, 32
          %725 = vsyncadd [#allocation21], %s724
          %s727 = sshll.u32 [#allocation20], 4
          %s728 = int_to_ptr.vmem [resolvable:$true] %s727
          %730 = dma.hbm_to_vmem [thread:$0]  %s13, 32, %s728, [#allocation21]
        $region64: #{tpu_custom_call.1} parent=11 // pred_fallthru
          _
        // Predicated region
        $region65: #{tpu_custom_call.1} parent=11 // pred_check
          %p731 = pneg %p364
        $region66: #{tpu_custom_call.1} parent=11 // pred_check_branch
          %733 = sbr.rel (%p731) target = $region68
        $region67: #{tpu_custom_call.1} parent=11 // pred_region
          %s735 = ssub.s32 512, 512
          %736 = vsyncadd [#allocation21], %s735
          %s737 = sshll.u32 [#allocation22], 4
          %s738 = int_to_ptr.vmem [resolvable:$true] %s737
          %743 = dma.hbm_to_vmem [thread:$0]  %s14, 512, %s738, [#allocation21], 128, 128, 8
        $region68: #{tpu_custom_call.1} parent=11 // pred_fallthru
          _
        // Predicated region
        $region69: #{tpu_custom_call.1} parent=11 // pred_check
          %p744 = pneg %p385
        $region70: #{tpu_custom_call.1} parent=11 // pred_check_branch
          %746 = sbr.rel (%p744) target = $region72
        $region71: #{tpu_custom_call.1} parent=11 // pred_region
          %s748 = ssub.s32 512, 512
          %749 = vsyncadd [#allocation24], %s748
          %s750 = sshll.u32 [#allocation23], 4
          %s751 = int_to_ptr.vmem [resolvable:$true] %s750
          %756 = dma.hbm_to_vmem [thread:$0]  %s15, 512, %s751, [#allocation24], 128, 128, 8
        $region72: #{tpu_custom_call.1} parent=11 // pred_fallthru
          _
        // Predicated region
        $region73: #{tpu_custom_call.1} parent=11 // pred_check
          %p757 = pneg %p406
        $region74: #{tpu_custom_call.1} parent=11 // pred_check_branch
          %759 = sbr.rel (%p757) target = $region76
        $region75: #{tpu_custom_call.1} parent=11 // pred_region
          %s761 = ssub.s32 32, 32
          %762 = vsyncadd [#allocation24], %s761
          %s764 = sshll.u32 [#allocation25], 4
          %s765 = int_to_ptr.vmem [resolvable:$true] %s764
          %767 = dma.hbm_to_vmem [thread:$0]  %s16, 32, %s765, [#allocation24]
        $region76: #{tpu_custom_call.1} parent=11 // pred_fallthru
          _
        // Predicated region
        $region77: #{tpu_custom_call.1} parent=11 // pred_check
          %p768 = pneg %p427
        $region78: #{tpu_custom_call.1} parent=11 // pred_check_branch
          %770 = sbr.rel (%p768) target = $region80
        $region79: #{tpu_custom_call.1} parent=11 // pred_region
          _
        $region80: #{tpu_custom_call.1} parent=11 // pred_fallthru
          _
        // Predicated region
        $region81: #{tpu_custom_call.1} parent=11 // pred_check
          %p771 = pneg %p448
        $region82: #{tpu_custom_call.1} parent=11 // pred_check_branch
          %773 = sbr.rel (%p771) target = $region84
        $region83: #{tpu_custom_call.1} parent=11 // pred_region
          %s775 = ssub.s32 16, 16
          %776 = vsyncadd [#allocation27], %s775
          %s778 = sshll.u32 [#allocation26], 4
          %s779 = int_to_ptr.vmem [resolvable:$true] %s778
          %781 = dma.hbm_to_vmem [thread:$0]  %s18, 16, %s779, [#allocation27]
        $region84: #{tpu_custom_call.1} parent=11 // pred_fallthru
          _
        // Predicated region
        $region85: #{tpu_custom_call.1} parent=11 // pred_check
          %p782 = pneg %p469
        $region86: #{tpu_custom_call.1} parent=11 // pred_check_branch
          %784 = sbr.rel (%p782) target = $region88
        $region87: #{tpu_custom_call.1} parent=11 // pred_region
          _
        $region88: #{tpu_custom_call.1} parent=11 // pred_fallthru
          _
        // Predicated region
        $region89: #{tpu_custom_call.1} parent=11 // pred_check
          %p785 = pneg %p490
        $region90: #{tpu_custom_call.1} parent=11 // pred_check_branch
          %787 = sbr.rel (%p785) target = $region92
        $region91: #{tpu_custom_call.1} parent=11 // pred_region
          _
        $region92: #{tpu_custom_call.1} parent=11 // pred_fallthru
          _
        // Predicated region
        $region93: #{tpu_custom_call.1} parent=11 // pred_check
          %p788 = pneg %p511
        $region94: #{tpu_custom_call.1} parent=11 // pred_check_branch
          %790 = sbr.rel (%p788) target = $region96
        $region95: #{tpu_custom_call.1} parent=11 // pred_region
          %s792 = ssub.s32 512, 512
          %793 = vsyncadd [#allocation27], %s792
          %s794 = sshll.u32 [#allocation28], 4
          %s795 = int_to_ptr.vmem [resolvable:$true] %s794
          %800 = dma.hbm_to_vmem [thread:$0]  %s21, 512, %s795, [#allocation27], 64, 64, 4
        $region96: #{tpu_custom_call.1} parent=11 // pred_fallthru
          _
        // Predicated region
        $region97: #{tpu_custom_call.1} parent=11 // pred_check
          %p801 = pneg %p532
        $region98: #{tpu_custom_call.1} parent=11 // pred_check_branch
          %803 = sbr.rel (%p801) target = $region100
        $region99: #{tpu_custom_call.1} parent=11 // pred_region
          _
        $region100: #{tpu_custom_call.1} parent=11 // pred_fallthru
          _
        // Predicated region
        $region101: #{tpu_custom_call.1} parent=11 // pred_check
          %p804 = pneg %p553
        $region102: #{tpu_custom_call.1} parent=11 // pred_check_branch
          %806 = sbr.rel (%p804) target = $region104
        $region103: #{tpu_custom_call.1} parent=11 // pred_region
          _
        $region104: #{tpu_custom_call.1} parent=11 // pred_fallthru
          _
      $region12: #{tpu_custom_call.1} parent=5 // pred_fallthru
        _
      %p807 = scmp.lt.s32.totalorder %s44, 2
      // Predicated region
      $region105: #{tpu_custom_call.1} parent=5 // pred_check
        %p808 = pneg %p807
      $region106: #{tpu_custom_call.1} parent=5 // pred_check_branch
        %810 = sbr.rel (%p808) target = $region108
      $region107: #{tpu_custom_call.1} parent=5 // pred_region
        // Predicated region
        $region109: #{tpu_custom_call.1} parent=107 // pred_check
          %p811 = pneg %p64
        $region110: #{tpu_custom_call.1} parent=107 // pred_check_branch
          %813 = sbr.rel (%p811) target = $region112
        $region111: #{tpu_custom_call.1} parent=107 // pred_region
          %s814 = sand.u32 %s54, 1
          %s815 = scalar_lea.sflag [#allocation3], %s814
          %s816 = sand.u32 %s54, 1
          %s817 = smul.addr %s816, 8
          %s818 = scalar_lea.vmem [#allocation2], %s817
          %s820 = ssub.s32 128, 128
          %821 = vsyncadd %s815, %s820
          %s822 = smul.addr %s44, 128
          %s823 = scalar_lea.hbm %s0, %s822
          %s825 = sshll.u32 %s818, 4
          %s826 = int_to_ptr.vmem [resolvable:$true] %s825
          %828 = dma.hbm_to_vmem [thread:$0]  %s823, 128, %s826, %s815
        $region112: #{tpu_custom_call.1} parent=107 // pred_fallthru
          _
      $region108: #{tpu_custom_call.1} parent=5 // pred_fallthru
        _
      %p829 = scmp.le.s32.totalorder 1, %s44
      %p830 = scmp.lt.s32.totalorder %s44, 3
      %p831 = pnand %p829, %p830
      %p832 = pneg %p831
      // Predicated region
      $region113: #{tpu_custom_call.1} parent=5 // pred_check
        _
      $region114: #{tpu_custom_call.1} parent=5 // pred_check_branch
        %834 = sbr.rel (%p831) target = $region116
      $region115: #{tpu_custom_call.1} parent=5 // pred_region
        %s835 = ssub.s32 %s44, 1
        %s836 = sand.u32 %s57, 1
        %s837 = scalar_lea.sflag [#allocation3], %s836
        %s838 = sand.u32 %s57, 1
        %s839 = smul.addr %s838, 8
        %s840 = scalar_lea.vmem [#allocation2], %s839
        // Predicated region
        $region117: #{tpu_custom_call.1} parent=115 // pred_check
          %p841 = pneg %p70
        $region118: #{tpu_custom_call.1} parent=115 // pred_check_branch
          %843 = sbr.rel (%p841) target = $region120
        $region119: #{tpu_custom_call.1} parent=115 // pred_region
          %844 = dma.done %s837, 128
        $region120: #{tpu_custom_call.1} parent=115 // pred_fallthru
          _
        // Predicated region
        $region121: #{tpu_custom_call.1} parent=115 // pred_check
          %p845 = pneg %p91
        $region122: #{tpu_custom_call.1} parent=115 // pred_check_branch
          %847 = sbr.rel (%p845) target = $region124
        $region123: #{tpu_custom_call.1} parent=115 // pred_region
          %848 = dma.done [#allocation6], 256
        $region124: #{tpu_custom_call.1} parent=115 // pred_fallthru
          _
        // Predicated region
        $region125: #{tpu_custom_call.1} parent=115 // pred_check
          %p849 = pneg %p112
        $region126: #{tpu_custom_call.1} parent=115 // pred_check_branch
          %851 = sbr.rel (%p849) target = $region128
        $region127: #{tpu_custom_call.1} parent=115 // pred_region
          %852 = dma.done [#allocation6], 16
        $region128: #{tpu_custom_call.1} parent=115 // pred_fallthru
          _
        // Predicated region
        $region129: #{tpu_custom_call.1} parent=115 // pred_check
          %p853 = pneg %p154
        $region130: #{tpu_custom_call.1} parent=115 // pred_check_branch
          %855 = sbr.rel (%p853) target = $region132
        $region131: #{tpu_custom_call.1} parent=115 // pred_region
          %856 = dma.done [#allocation9], 16
        $region132: #{tpu_custom_call.1} parent=115 // pred_fallthru
          _
        // Predicated region
        $region133: #{tpu_custom_call.1} parent=115 // pred_check
          %p857 = pneg %p175
        $region134: #{tpu_custom_call.1} parent=115 // pred_check_branch
          %859 = sbr.rel (%p857) target = $region136
        $region135: #{tpu_custom_call.1} parent=115 // pred_region
          %860 = dma.done [#allocation9], 256
        $region136: #{tpu_custom_call.1} parent=115 // pred_fallthru
          _
        // Predicated region
        $region137: #{tpu_custom_call.1} parent=115 // pred_check
          %p861 = pneg %p196
        $region138: #{tpu_custom_call.1} parent=115 // pred_check_branch
          %863 = sbr.rel (%p861) target = $region140
        $region139: #{tpu_custom_call.1} parent=115 // pred_region
          %864 = dma.done [#allocation12], 16
        $region140: #{tpu_custom_call.1} parent=115 // pred_fallthru
          _
        // Predicated region
        $region141: #{tpu_custom_call.1} parent=115 // pred_check
          %p865 = pneg %p217
        $region142: #{tpu_custom_call.1} parent=115 // pred_check_branch
          %867 = sbr.rel (%p865) target = $region144
        $region143: #{tpu_custom_call.1} parent=115 // pred_region
          %868 = dma.done [#allocation12], 256
        $region144: #{tpu_custom_call.1} parent=115 // pred_fallthru
          _
        // Predicated region
        $region145: #{tpu_custom_call.1} parent=115 // pred_check
          %p869 = pneg %p238
        $region146: #{tpu_custom_call.1} parent=115 // pred_check_branch
          %871 = sbr.rel (%p869) target = $region148
        $region147: #{tpu_custom_call.1} parent=115 // pred_region
          %872 = dma.done [#allocation15], 16
        $region148: #{tpu_custom_call.1} parent=115 // pred_fallthru
          _
        // Predicated region
        $region149: #{tpu_custom_call.1} parent=115 // pred_check
          %p873 = pneg %p280
        $region150: #{tpu_custom_call.1} parent=115 // pred_check_branch
          %875 = sbr.rel (%p873) target = $region152
        $region151: #{tpu_custom_call.1} parent=115 // pred_region
          %876 = dma.done [#allocation15], 16
        $region152: #{tpu_custom_call.1} parent=115 // pred_fallthru
          _
        // Predicated region
        $region153: #{tpu_custom_call.1} parent=115 // pred_check
          %p877 = pneg %p301
        $region154: #{tpu_custom_call.1} parent=115 // pred_check_branch
          %879 = sbr.rel (%p877) target = $region156
        $region155: #{tpu_custom_call.1} parent=115 // pred_region
          %880 = dma.done [#allocation18], 512
        $region156: #{tpu_custom_call.1} parent=115 // pred_fallthru
          _
        // Predicated region
        $region157: #{tpu_custom_call.1} parent=115 // pred_check
          %p881 = pneg %p322
        $region158: #{tpu_custom_call.1} parent=115 // pred_check_branch
          %883 = sbr.rel (%p881) target = $region160
        $region159: #{tpu_custom_call.1} parent=115 // pred_region
          %884 = dma.done [#allocation18], 512
        $region160: #{tpu_custom_call.1} parent=115 // pred_fallthru
          _
        // Predicated region
        $region161: #{tpu_custom_call.1} parent=115 // pred_check
          %p885 = pneg %p343
        $region162: #{tpu_custom_call.1} parent=115 // pred_check_branch
          %887 = sbr.rel (%p885) target = $region164
        $region163: #{tpu_custom_call.1} parent=115 // pred_region
          %888 = dma.done [#allocation21], 32
        $region164: #{tpu_custom_call.1} parent=115 // pred_fallthru
          _
        // Predicated region
        $region165: #{tpu_custom_call.1} parent=115 // pred_check
          %p889 = pneg %p364
        $region166: #{tpu_custom_call.1} parent=115 // pred_check_branch
          %891 = sbr.rel (%p889) target = $region168
        $region167: #{tpu_custom_call.1} parent=115 // pred_region
          %892 = dma.done [#allocation21], 512
        $region168: #{tpu_custom_call.1} parent=115 // pred_fallthru
          _
        // Predicated region
        $region169: #{tpu_custom_call.1} parent=115 // pred_check
          %p893 = pneg %p385
        $region170: #{tpu_custom_call.1} parent=115 // pred_check_branch
          %895 = sbr.rel (%p893) target = $region172
        $region171: #{tpu_custom_call.1} parent=115 // pred_region
          %896 = dma.done [#allocation24], 512
        $region172: #{tpu_custom_call.1} parent=115 // pred_fallthru
          _
        // Predicated region
        $region173: #{tpu_custom_call.1} parent=115 // pred_check
          %p897 = pneg %p406
        $region174: #{tpu_custom_call.1} parent=115 // pred_check_branch
          %899 = sbr.rel (%p897) target = $region176
        $region175: #{tpu_custom_call.1} parent=115 // pred_region
          %900 = dma.done [#allocation24], 32
        $region176: #{tpu_custom_call.1} parent=115 // pred_fallthru
          _
        // Predicated region
        $region177: #{tpu_custom_call.1} parent=115 // pred_check
          %p901 = pneg %p448
        $region178: #{tpu_custom_call.1} parent=115 // pred_check_branch
          %903 = sbr.rel (%p901) target = $region180
        $region179: #{tpu_custom_call.1} parent=115 // pred_region
          %904 = dma.done [#allocation27], 16
        $region180: #{tpu_custom_call.1} parent=115 // pred_fallthru
          _
        // Predicated region
        $region181: #{tpu_custom_call.1} parent=115 // pred_check
          %p905 = pneg %p511
        $region182: #{tpu_custom_call.1} parent=115 // pred_check_branch
          %907 = sbr.rel (%p905) target = $region184
        $region183: #{tpu_custom_call.1} parent=115 // pred_region
          %908 = dma.done [#allocation27], 512
        $region184: #{tpu_custom_call.1} parent=115 // pred_fallthru
          _
        %s909 = sand.u32 %s57, 1
        %s910 = scalar_lea.sflag [#allocation3], %s909
        %s911 = sand.u32 %s57, 1
        %s912 = smul.addr %s911, 8
        %s913 = scalar_lea.vmem [#allocation2], %s912
        %p914 = pneg %p70
        %p915 = pneg %p67
        %p916 = pneg %p91
        %p917 = pneg %p88
        %p918 = pneg %p112
        %p919 = pneg %p109
        %p920 = pneg %p133
        %p921 = pneg %p130
        %p922 = pneg %p154
        %p923 = pneg %p151
        %p924 = pneg %p175
        %p925 = pneg %p172
        %p926 = pneg %p196
        %p927 = pneg %p193
        %p928 = pneg %p217
        %p929 = pneg %p214
        %p930 = pneg %p238
        %p931 = pneg %p235
        %p932 = pneg %p259
        %p933 = pneg %p256
        %p934 = pneg %p280
        %p935 = pneg %p277
        %p936 = pneg %p301
        %p937 = pneg %p298
        %p938 = pneg %p322
        %p939 = pneg %p319
        %p940 = pneg %p343
        %p941 = pneg %p340
        %p942 = pneg %p364
        %p943 = pneg %p361
        %p944 = pneg %p385
        %p945 = pneg %p382
        %p946 = pneg %p406
        %p947 = pneg %p403
        %p948 = pneg %p427
        %p949 = pneg %p424
        %p950 = pneg %p448
        %p951 = pneg %p445
        %p952 = pneg %p469
        %p953 = pneg %p466
        %p954 = pneg %p490
        %p955 = pneg %p487
        %p956 = pneg %p511
        %p957 = pneg %p508
        %p958 = pneg %p532
        %p959 = pneg %p529
        %p960 = pneg %p553
        %p961 = pneg %p550
        %p962 = pneg %p579
        %p963 = pneg %p576
        %s964 = sand.u32 %s566, 1
        %s965 = scalar_lea.sflag [#allocation4], %s964
        %s966 = sand.u32 %s566, 1
        %s967 = smul.addr %s966, 8
        %s968 = scalar_lea.vmem [#allocation29], %s967
        %v970 = vld [vmem:[%s840] sm:$0xff]
        %v971 = vpack.c.bf16 %v970, %v970
        %v972 = vld [vmem:[#allocation5] sm:$0xf]
        %v973 = vld [vmem:[#allocation5 + $0x4] sm:$0xf]
        %v974 = vld [vmem:[#allocation5 + $0x8] sm:$0xf]
        %v975 = vld [vmem:[#allocation5 + $0xc] sm:$0xf]
        %v976 = vld [vmem:[#allocation7] sm:$0x1]
        %v978 = vlaneseq
        %v979 = vshrl.u32 %v978, 7
        %v980 = vsub.s32 0, %v979
        %v981 = vrot.slane %v976, %v980
        %v987 = vunpack.c.l.b16 %v972
        %v988 = vunpack.c.l.b16 %v973
        %v989 = vunpack.c.l.b16 %v974
        %v990 = vunpack.c.l.b16 %v975
        %v991 = vpack.c.b16 %v988, %v987
        %v992 = vpack.c.b16 %v990, %v989
        %vm995 = vcmask 261120
        %v997 = vsel %vm995, %v971, 0
        %999 = vmatprep.subr.bf16.mxu0 0
        %1000 = vmatpush1.bf16.msra.mxu0 0
        %1001 = vmatprep.subr.bf16.mxu0 0
        %1002 = vmatpush1.bf16.msra.mxu0 0
        %1003 = vmatprep.subr.bf16.mxu0 0
        %1004 = vmatpush1.bf16.msra.mxu0 0
        %1005 = vmatprep.subr.bf16.mxu0 0
        %1006 = vmatpush1.bf16.msra.mxu0 0
        %1007 = vmatprep.subr.bf16.mxu0 0
        %1008 = vmatpush1.bf16.msra.mxu0 0
        %1009 = vmatprep.subr.bf16.mxu0 0
        %1010 = vmatpush1.bf16.msra.mxu0 0
        %1011 = vmatprep.subr.bf16.mxu0 0
        %1012 = vmatpush1.bf16.msra.mxu0 %v992
        %1013 = vmatprep.subr.bf16.mxu0 0
        %1014 = vmatpush1.bf16.msra.mxu0 %v991
        %1015 = vmatprep.subr.bf16.mxu0 0
        %1016 = vmatpush2.bf16.msra.mxu0 0
        %1017 = vmatprep.subr.bf16.mxu0 0
        %1018 = vmatpush2.bf16.msra.mxu0 0
        %1019 = vmatprep.subr.bf16.mxu0 0
        %1020 = vmatpush2.bf16.msra.mxu0 0
        %1021 = vmatprep.subr.bf16.mxu0 0
        %1022 = vmatpush2.bf16.msra.mxu0 0
        %1023 = vmatprep.subr.bf16.mxu0 0
        %1024 = vmatpush2.bf16.msra.mxu0 0
        %1025 = vmatprep.subr.bf16.mxu0 0
        %1026 = vmatpush2.bf16.msra.mxu0 0
        %1027 = vmatprep.subr.bf16.mxu0 0
        %1028 = vmatpush2.bf16.msra.mxu0 0
        %1029 = vmatprep.subr.bf16.mxu0 0
        %1030 = vmatpush2.bf16.msra.mxu0 0
        %1031 = vmatprep.mubr.bf16.mxu0 0
        %1032 = vmatmul.mubr.bf16.gmra.mxu0 %v997
        %v1033 = vpop.f32.mrf.mxu0
        %v1034 = vadd.f32 %v981, %v1033
        %v1035 = vpop.f32.mrf.mxu0
        %v1036 = vpop.f32.mrf.mxu0
        %v1037 = vpop.f32.mrf.mxu0
        %1038 = vdwg.mxu0
        %v1039 = vmax.f32 %v1034, 0.0
        %v1040 = vpack.c.bf16 %v1039, %v1039
        %v1041 = vld [vmem:[%s3] sm:$0xf]
        %v1042 = vld [vmem:[%s3 + $0x4] sm:$0xf]
        %v1043 = vld [vmem:[%s3 + $0x8] sm:$0xf]
        %v1044 = vld [vmem:[%s3 + $0xc] sm:$0xf]
        %v1045 = vld [vmem:[%s3 + $0x10] sm:$0xf]
        %v1046 = vld [vmem:[%s3 + $0x14] sm:$0xf]
        %v1047 = vld [vmem:[%s3 + $0x18] sm:$0xf]
        %v1048 = vld [vmem:[%s3 + $0x1c] sm:$0xf]
        %v1049 = vld [vmem:[#allocation8] sm:$0x1]
        %v1051 = vlaneseq
        %v1052 = vshrl.u32 %v1051, 7
        %v1053 = vsub.s32 0, %v1052
        %v1054 = vrot.slane %v1049, %v1053
        %v1064 = vunpack.c.l.b16 %v1041
        %v1065 = vunpack.c.l.b16 %v1042
        %v1066 = vunpack.c.l.b16 %v1043
        %v1067 = vunpack.c.l.b16 %v1044
        %v1068 = vunpack.c.l.b16 %v1045
        %v1069 = vunpack.c.l.b16 %v1046
        %v1070 = vunpack.c.l.b16 %v1047
        %v1071 = vunpack.c.l.b16 %v1048
        %v1072 = vpack.c.b16 %v1065, %v1064
        %v1073 = vpack.c.b16 %v1067, %v1066
        %v1074 = vpack.c.b16 %v1069, %v1068
        %v1075 = vpack.c.b16 %v1071, %v1070
        %vm1080 = vcmask 523264
        %v1082 = vsel %vm1080, %v1040, 0
        %1084 = vmatprep.subr.bf16.mxu0 0
        %1085 = vmatpush1.bf16.msra.mxu0 0
        %1086 = vmatprep.subr.bf16.mxu0 0
        %1087 = vmatpush1.bf16.msra.mxu0 0
        %1088 = vmatprep.subr.bf16.mxu0 0
        %1089 = vmatpush1.bf16.msra.mxu0 0
        %1090 = vmatprep.subr.bf16.mxu0 0
        %1091 = vmatpush1.bf16.msra.mxu0 0
        %1092 = vmatprep.subr.bf16.mxu0 0
        %1093 = vmatpush1.bf16.msra.mxu0 %v1075
        %1094 = vmatprep.subr.bf16.mxu0 0
        %1095 = vmatpush1.bf16.msra.mxu0 %v1074
        %1096 = vmatprep.subr.bf16.mxu0 0
        %1097 = vmatpush1.bf16.msra.mxu0 %v1073
        %1098 = vmatprep.subr.bf16.mxu0 0
        %1099 = vmatpush1.bf16.msra.mxu0 %v1072
        %1100 = vmatprep.subr.bf16.mxu0 0
        %1101 = vmatpush2.bf16.msra.mxu0 0
        %1102 = vmatprep.subr.bf16.mxu0 0
        %1103 = vmatpush2.bf16.msra.mxu0 0
        %1104 = vmatprep.subr.bf16.mxu0 0
        %1105 = vmatpush2.bf16.msra.mxu0 0
        %1106 = vmatprep.subr.bf16.mxu0 0
        %1107 = vmatpush2.bf16.msra.mxu0 0
        %1108 = vmatprep.subr.bf16.mxu0 0
        %1109 = vmatpush2.bf16.msra.mxu0 0
        %1110 = vmatprep.subr.bf16.mxu0 0
        %1111 = vmatpush2.bf16.msra.mxu0 0
        %1112 = vmatprep.subr.bf16.mxu0 0
        %1113 = vmatpush2.bf16.msra.mxu0 0
        %1114 = vmatprep.subr.bf16.mxu0 0
        %1115 = vmatpush2.bf16.msra.mxu0 0
        %1116 = vmatprep.mubr.bf16.mxu0 0
        %1117 = vmatmul.mubr.bf16.gmra.mxu0 %v1082
        %v1118 = vpop.f32.mrf.mxu0
        %v1119 = vadd.f32 %v1054, %v1118
        %v1120 = vpop.f32.mrf.mxu0
        %v1121 = vpop.f32.mrf.mxu0
        %v1122 = vpop.f32.mrf.mxu0
        %1123 = vdwg.mxu0
        %v1124 = vmax.f32 %v1119, 0.0
        %v1125 = vpack.c.bf16 %v1124, %v1124
        %v1126 = vld [vmem:[#allocation10] sm:$0xf]
        %v1127 = vld [vmem:[#allocation10 + $0x4] sm:$0xf]
        %v1128 = vld [vmem:[#allocation10 + $0x8] sm:$0xf]
        %v1129 = vld [vmem:[#allocation10 + $0xc] sm:$0xf]
        %v1130 = vld [vmem:[#allocation11] sm:$0x1]
        %v1132 = vlaneseq
        %v1133 = vshrl.u32 %v1132, 7
        %v1134 = vsub.s32 0, %v1133
        %v1135 = vrot.slane %v1130, %v1134
        %v1141 = vunpack.c.l.b16 %v1126
        %v1142 = vunpack.c.l.b16 %v1127
        %v1143 = vunpack.c.l.b16 %v1128
        %v1144 = vunpack.c.l.b16 %v1129
        %v1145 = vpack.c.b16 %v1142, %v1141
        %v1146 = vpack.c.b16 %v1144, %v1143
        %v1150 = vsel %vm995, %v1125, 0
        %1152 = vmatprep.subr.bf16.mxu0 0
        %1153 = vmatpush1.bf16.msra.mxu0 0
        %1154 = vmatprep.subr.bf16.mxu0 0
        %1155 = vmatpush1.bf16.msra.mxu0 0
        %1156 = vmatprep.subr.bf16.mxu0 0
        %1157 = vmatpush1.bf16.msra.mxu0 0
        %1158 = vmatprep.subr.bf16.mxu0 0
        %1159 = vmatpush1.bf16.msra.mxu0 0
        %1160 = vmatprep.subr.bf16.mxu0 0
        %1161 = vmatpush1.bf16.msra.mxu0 0
        %1162 = vmatprep.subr.bf16.mxu0 0
        %1163 = vmatpush1.bf16.msra.mxu0 0
        %1164 = vmatprep.subr.bf16.mxu0 0
        %1165 = vmatpush1.bf16.msra.mxu0 %v1146
        %1166 = vmatprep.subr.bf16.mxu0 0
        %1167 = vmatpush1.bf16.msra.mxu0 %v1145
        %1168 = vmatprep.subr.bf16.mxu0 0
        %1169 = vmatpush2.bf16.msra.mxu0 0
        %1170 = vmatprep.subr.bf16.mxu0 0
        %1171 = vmatpush2.bf16.msra.mxu0 0
        %1172 = vmatprep.subr.bf16.mxu0 0
        %1173 = vmatpush2.bf16.msra.mxu0 0
        %1174 = vmatprep.subr.bf16.mxu0 0
        %1175 = vmatpush2.bf16.msra.mxu0 0
        %1176 = vmatprep.subr.bf16.mxu0 0
        %1177 = vmatpush2.bf16.msra.mxu0 0
        %1178 = vmatprep.subr.bf16.mxu0 0
        %1179 = vmatpush2.bf16.msra.mxu0 0
        %1180 = vmatprep.subr.bf16.mxu0 0
        %1181 = vmatpush2.bf16.msra.mxu0 0
        %1182 = vmatprep.subr.bf16.mxu0 0
        %1183 = vmatpush2.bf16.msra.mxu0 0
        %1184 = vmatprep.mubr.bf16.mxu0 0
        %1185 = vmatmul.mubr.bf16.gmra.mxu0 %v1150
        %v1186 = vpop.f32.mrf.mxu0
        %v1187 = vadd.f32 %v1135, %v1186
        %v1188 = vpop.f32.mrf.mxu0
        %v1189 = vpop.f32.mrf.mxu0
        %v1190 = vpop.f32.mrf.mxu0
        %1191 = vdwg.mxu0
        %v1192 = vmax.f32 %v1187, 0.0
        %v1193 = vpack.c.bf16 %v1192, %v1192
        %v1194 = vld [vmem:[#allocation13] sm:$0xf]
        %v1195 = vld [vmem:[#allocation13 + $0x4] sm:$0xf]
        %v1196 = vld [vmem:[#allocation13 + $0x8] sm:$0xf]
        %v1197 = vld [vmem:[#allocation13 + $0xc] sm:$0xf]
        %v1198 = vld [vmem:[#allocation14] sm:$0x1]
        %v1200 = vlaneseq
        %v1201 = vshrl.u32 %v1200, 7
        %v1202 = vsub.s32 0, %v1201
        %v1203 = vrot.slane %v1198, %v1202
        %v1209 = vunpack.c.l.b16 %v1194
        %v1210 = vunpack.c.l.b16 %v1195
        %v1211 = vunpack.c.l.b16 %v1196
        %v1212 = vunpack.c.l.b16 %v1197
        %v1213 = vpack.c.b16 %v1210, %v1209
        %v1214 = vpack.c.b16 %v1212, %v1211
        %v1218 = vsel %vm995, %v1193, 0
        %1220 = vmatprep.subr.bf16.mxu0 0
        %1221 = vmatpush1.bf16.msra.mxu0 0
        %1222 = vmatprep.subr.bf16.mxu0 0
        %1223 = vmatpush1.bf16.msra.mxu0 0
        %1224 = vmatprep.subr.bf16.mxu0 0
        %1225 = vmatpush1.bf16.msra.mxu0 0
        %1226 = vmatprep.subr.bf16.mxu0 0
        %1227 = vmatpush1.bf16.msra.mxu0 0
        %1228 = vmatprep.subr.bf16.mxu0 0
        %1229 = vmatpush1.bf16.msra.mxu0 0
        %1230 = vmatprep.subr.bf16.mxu0 0
        %1231 = vmatpush1.bf16.msra.mxu0 0
        %1232 = vmatprep.subr.bf16.mxu0 0
        %1233 = vmatpush1.bf16.msra.mxu0 %v1214
        %1234 = vmatprep.subr.bf16.mxu0 0
        %1235 = vmatpush1.bf16.msra.mxu0 %v1213
        %1236 = vmatprep.subr.bf16.mxu0 0
        %1237 = vmatpush2.bf16.msra.mxu0 0
        %1238 = vmatprep.subr.bf16.mxu0 0
        %1239 = vmatpush2.bf16.msra.mxu0 0
        %1240 = vmatprep.subr.bf16.mxu0 0
        %1241 = vmatpush2.bf16.msra.mxu0 0
        %1242 = vmatprep.subr.bf16.mxu0 0
        %1243 = vmatpush2.bf16.msra.mxu0 0
        %1244 = vmatprep.subr.bf16.mxu0 0
        %1245 = vmatpush2.bf16.msra.mxu0 0
        %1246 = vmatprep.subr.bf16.mxu0 0
        %1247 = vmatpush2.bf16.msra.mxu0 0
        %1248 = vmatprep.subr.bf16.mxu0 0
        %1249 = vmatpush2.bf16.msra.mxu0 0
        %1250 = vmatprep.subr.bf16.mxu0 0
        %1251 = vmatpush2.bf16.msra.mxu0 0
        %1252 = vmatprep.mubr.bf16.mxu0 0
        %1253 = vmatmul.mubr.bf16.gmra.mxu0 %v1218
        %v1254 = vpop.f32.mrf.mxu0
        %v1255 = vadd.f32 %v1203, %v1254
        %v1256 = vpop.f32.mrf.mxu0
        %v1257 = vpop.f32.mrf.mxu0
        %v1258 = vpop.f32.mrf.mxu0
        %1259 = vdwg.mxu0
        %v1260 = vmax.f32 %v1255, 0.0
        %v1261 = vpack.c.bf16 %v1260, %v1260
        %v1262 = vld [vmem:[%s9] sm:$0xf]
        %v1263 = vld [vmem:[%s9 + $0x4] sm:$0xf]
        %v1264 = vld [vmem:[%s9 + $0x8] sm:$0xf]
        %v1265 = vld [vmem:[%s9 + $0xc] sm:$0xf]
        %v1266 = vld [vmem:[%s9 + $0x10] sm:$0xf]
        %v1267 = vld [vmem:[%s9 + $0x14] sm:$0xf]
        %v1268 = vld [vmem:[%s9 + $0x18] sm:$0xf]
        %v1269 = vld [vmem:[%s9 + $0x1c] sm:$0xf]
        %v1270 = vld [vmem:[#allocation16] sm:$0x1]
        %v1272 = vlaneseq
        %v1273 = vshrl.u32 %v1272, 7
        %v1274 = vsub.s32 0, %v1273
        %v1275 = vrot.slane %v1270, %v1274
        %v1285 = vunpack.c.l.b16 %v1262
        %v1286 = vunpack.c.l.b16 %v1263
        %v1287 = vunpack.c.l.b16 %v1264
        %v1288 = vunpack.c.l.b16 %v1265
        %v1289 = vunpack.c.l.b16 %v1266
        %v1290 = vunpack.c.l.b16 %v1267
        %v1291 = vunpack.c.l.b16 %v1268
        %v1292 = vunpack.c.l.b16 %v1269
        %v1293 = vpack.c.b16 %v1286, %v1285
        %v1294 = vpack.c.b16 %v1288, %v1287
        %v1295 = vpack.c.b16 %v1290, %v1289
        %v1296 = vpack.c.b16 %v1292, %v1291
        %v1302 = vsel %vm1080, %v1261, 0
        %1304 = vmatprep.subr.bf16.mxu0 0
        %1305 = vmatpush1.bf16.msra.mxu0 0
        %1306 = vmatprep.subr.bf16.mxu0 0
        %1307 = vmatpush1.bf16.msra.mxu0 0
        %1308 = vmatprep.subr.bf16.mxu0 0
        %1309 = vmatpush1.bf16.msra.mxu0 0
        %1310 = vmatprep.subr.bf16.mxu0 0
        %1311 = vmatpush1.bf16.msra.mxu0 0
        %1312 = vmatprep.subr.bf16.mxu0 0
        %1313 = vmatpush1.bf16.msra.mxu0 %v1296
        %1314 = vmatprep.subr.bf16.mxu0 0
        %1315 = vmatpush1.bf16.msra.mxu0 %v1295
        %1316 = vmatprep.subr.bf16.mxu0 0
        %1317 = vmatpush1.bf16.msra.mxu0 %v1294
        %1318 = vmatprep.subr.bf16.mxu0 0
        %1319 = vmatpush1.bf16.msra.mxu0 %v1293
        %1320 = vmatprep.subr.bf16.mxu0 0
        %1321 = vmatpush2.bf16.msra.mxu0 0
        %1322 = vmatprep.subr.bf16.mxu0 0
        %1323 = vmatpush2.bf16.msra.mxu0 0
        %1324 = vmatprep.subr.bf16.mxu0 0
        %1325 = vmatpush2.bf16.msra.mxu0 0
        %1326 = vmatprep.subr.bf16.mxu0 0
        %1327 = vmatpush2.bf16.msra.mxu0 0
        %1328 = vmatprep.subr.bf16.mxu0 0
        %1329 = vmatpush2.bf16.msra.mxu0 0
        %1330 = vmatprep.subr.bf16.mxu0 0
        %1331 = vmatpush2.bf16.msra.mxu0 0
        %1332 = vmatprep.subr.bf16.mxu0 0
        %1333 = vmatpush2.bf16.msra.mxu0 0
        %1334 = vmatprep.subr.bf16.mxu0 0
        %1335 = vmatpush2.bf16.msra.mxu0 0
        %1336 = vmatprep.mubr.bf16.mxu0 0
        %1337 = vmatmul.mubr.bf16.gmra.mxu0 %v1302
        %v1338 = vpop.f32.mrf.mxu0
        %v1339 = vadd.f32 %v1275, %v1338
        %v1340 = vpop.f32.mrf.mxu0
        %v1341 = vpop.f32.mrf.mxu0
        %v1342 = vpop.f32.mrf.mxu0
        %1343 = vdwg.mxu0
        %v1344 = vmax.f32 %v1339, 0.0
        %v1345 = vpack.c.bf16 %v1344, %v1344
        %v1346 = vld [vmem:[#allocation17] sm:$0xff]
        %v1347 = vld [vmem:[#allocation17 + $0x8] sm:$0xff]
        %v1348 = vld [vmem:[#allocation17 + $0x10] sm:$0xff]
        %v1349 = vld [vmem:[#allocation17 + $0x18] sm:$0xff]
        %v1350 = vld [vmem:[#allocation19] sm:$0xff]
        %v1351 = vld [vmem:[#allocation19 + $0x8] sm:$0xff]
        %v1352 = vld [vmem:[#allocation19 + $0x10] sm:$0xff]
        %v1353 = vld [vmem:[#allocation19 + $0x18] sm:$0xff]
        %v1358 = vunpack.c.l.b16 %v1350
        %v1359 = vunpack.c.h.b16 %v1350
        %v1360 = vunpack.c.l.b16 %v1351
        %v1361 = vunpack.c.h.b16 %v1351
        %v1362 = vunpack.c.l.b16 %v1352
        %v1363 = vunpack.c.h.b16 %v1352
        %v1364 = vunpack.c.l.b16 %v1353
        %v1365 = vunpack.c.h.b16 %v1353
        %v1366 = vpack.c.b16 %v1360, %v1358
        %v1367 = vpack.c.b16 %v1361, %v1359
        %v1368 = vpack.c.b16 %v1364, %v1362
        %v1369 = vpack.c.b16 %v1365, %v1363
        %v1375 = vsel %vm995, %v1345, 0
        %1377 = vmatprep.subr.bf16.mxu0 0
        %1378 = vmatpush1.bf16.msra.mxu0 0
        %1379 = vmatprep.subr.bf16.mxu0 0
        %1380 = vmatpush1.bf16.msra.mxu0 0
        %1381 = vmatprep.subr.bf16.mxu0 0
        %1382 = vmatpush1.bf16.msra.mxu0 0
        %1383 = vmatprep.subr.bf16.mxu0 0
        %1384 = vmatpush1.bf16.msra.mxu0 0
        %1385 = vmatprep.subr.bf16.mxu0 0
        %1386 = vmatpush1.bf16.msra.mxu0 0
        %1387 = vmatprep.subr.bf16.mxu0 0
        %1388 = vmatpush1.bf16.msra.mxu0 0
        %1389 = vmatprep.subr.bf16.mxu0 %v1369
        %1390 = vmatpush1.bf16.msra.mxu0 %v1368
        %1391 = vmatprep.subr.bf16.mxu0 %v1367
        %1392 = vmatpush1.bf16.msra.mxu0 %v1366
        %1393 = vmatprep.subr.bf16.mxu0 0
        %1394 = vmatpush2.bf16.msra.mxu0 0
        %1395 = vmatprep.subr.bf16.mxu0 0
        %1396 = vmatpush2.bf16.msra.mxu0 0
        %1397 = vmatprep.subr.bf16.mxu0 0
        %1398 = vmatpush2.bf16.msra.mxu0 0
        %1399 = vmatprep.subr.bf16.mxu0 0
        %1400 = vmatpush2.bf16.msra.mxu0 0
        %1401 = vmatprep.subr.bf16.mxu0 0
        %1402 = vmatpush2.bf16.msra.mxu0 0
        %1403 = vmatprep.subr.bf16.mxu0 0
        %1404 = vmatpush2.bf16.msra.mxu0 0
        %1405 = vmatprep.subr.bf16.mxu0 0
        %1406 = vmatpush2.bf16.msra.mxu0 0
        %1407 = vmatprep.subr.bf16.mxu0 0
        %1408 = vmatpush2.bf16.msra.mxu0 0
        %1409 = vmatprep.mubr.bf16.mxu0 0
        %1410 = vmatmul.mubr.bf16.gmra.mxu0 %v1375
        %v1411 = vpop.f32.mrf.mxu0
        %v1412 = vadd.f32 0.0, %v1411
        %v1413 = vpop.f32.mrf.mxu0
        %v1414 = vadd.f32 0.0, %v1413
        %v1415 = vpop.f32.mrf.mxu0
        %v1416 = vpop.f32.mrf.mxu0
        %1417 = vdwg.mxu0
        %v1422 = vunpack.c.l.b16 %v1346
        %v1423 = vunpack.c.h.b16 %v1346
        %v1424 = vunpack.c.l.b16 %v1347
        %v1425 = vunpack.c.h.b16 %v1347
        %v1426 = vunpack.c.l.b16 %v1348
        %v1427 = vunpack.c.h.b16 %v1348
        %v1428 = vunpack.c.l.b16 %v1349
        %v1429 = vunpack.c.h.b16 %v1349
        %v1430 = vpack.c.b16 %v1424, %v1422
        %v1431 = vpack.c.b16 %v1425, %v1423
        %v1432 = vpack.c.b16 %v1428, %v1426
        %v1433 = vpack.c.b16 %v1429, %v1427
        %1438 = vmatprep.subr.bf16.mxu0 0
        %1439 = vmatpush1.bf16.msra.mxu0 0
        %1440 = vmatprep.subr.bf16.mxu0 0
        %1441 = vmatpush1.bf16.msra.mxu0 0
        %1442 = vmatprep.subr.bf16.mxu0 0
        %1443 = vmatpush1.bf16.msra.mxu0 0
        %1444 = vmatprep.subr.bf16.mxu0 0
        %1445 = vmatpush1.bf16.msra.mxu0 0
        %1446 = vmatprep.subr.bf16.mxu0 0
        %1447 = vmatpush1.bf16.msra.mxu0 0
        %1448 = vmatprep.subr.bf16.mxu0 0
        %1449 = vmatpush1.bf16.msra.mxu0 0
        %1450 = vmatprep.subr.bf16.mxu0 %v1433
        %1451 = vmatpush1.bf16.msra.mxu0 %v1432
        %1452 = vmatprep.subr.bf16.mxu0 %v1431
        %1453 = vmatpush1.bf16.msra.mxu0 %v1430
        %1454 = vmatprep.subr.bf16.mxu0 0
        %1455 = vmatpush2.bf16.msra.mxu0 0
        %1456 = vmatprep.subr.bf16.mxu0 0
        %1457 = vmatpush2.bf16.msra.mxu0 0
        %1458 = vmatprep.subr.bf16.mxu0 0
        %1459 = vmatpush2.bf16.msra.mxu0 0
        %1460 = vmatprep.subr.bf16.mxu0 0
        %1461 = vmatpush2.bf16.msra.mxu0 0
        %1462 = vmatprep.subr.bf16.mxu0 0
        %1463 = vmatpush2.bf16.msra.mxu0 0
        %1464 = vmatprep.subr.bf16.mxu0 0
        %1465 = vmatpush2.bf16.msra.mxu0 0
        %1466 = vmatprep.subr.bf16.mxu0 0
        %1467 = vmatpush2.bf16.msra.mxu0 0
        %1468 = vmatprep.subr.bf16.mxu0 0
        %1469 = vmatpush2.bf16.msra.mxu0 0
        %1470 = vmatprep.mubr.bf16.mxu0 0
        %1471 = vmatmul.mubr.bf16.gmra.mxu0 %v1218
        %v1472 = vpop.f32.mrf.mxu0
        %v1473 = vadd.f32 %v1412, %v1472
        %v1474 = vpop.f32.mrf.mxu0
        %v1475 = vadd.f32 %v1414, %v1474
        %v1476 = vpop.f32.mrf.mxu0
        %v1477 = vpop.f32.mrf.mxu0
        %1478 = vdwg.mxu0
        %v1479 = vld [vmem:[#allocation20] sm:$0x3]
        %v1481 = vlaneseq
        %v1482 = vshrl.u32 %v1481, 7
        %v1483 = vsub.s32 0, %v1482
        %v1484 = vrot.slane %v1479, %v1483
        %v1485 = vlaneseq
        %v1486 = vshrl.u32 %v1485, 7
        %v1487 = vsub.s32 1, %v1486
        %v1488 = vrot.slane %v1479, %v1487
        %v1491 = vadd.f32 %v1473, %v1484
        %v1492 = vadd.f32 %v1475, %v1488
        %v1493 = vmax.f32 %v1491, 0.0
        %v1494 = vmax.f32 %v1492, 0.0
        %v1495 = vpack.c.bf16 %v1493, %v1493
        %v1496 = vpack.c.bf16 %v1494, %v1494
        %v1497 = vld [vmem:[#allocation22] sm:$0xff]
        %v1498 = vld [vmem:[#allocation22 + $0x8] sm:$0xff]
        %v1499 = vld [vmem:[#allocation22 + $0x10] sm:$0xff]
        %v1500 = vld [vmem:[#allocation22 + $0x18] sm:$0xff]
        %v1501 = vld [vmem:[#allocation23] sm:$0xff]
        %v1502 = vld [vmem:[#allocation23 + $0x8] sm:$0xff]
        %v1503 = vld [vmem:[#allocation23 + $0x10] sm:$0xff]
        %v1504 = vld [vmem:[#allocation23 + $0x18] sm:$0xff]
        %v1509 = vunpack.c.l.b16 %v1501
        %v1510 = vunpack.c.h.b16 %v1501
        %v1511 = vunpack.c.l.b16 %v1502
        %v1512 = vunpack.c.h.b16 %v1502
        %v1513 = vunpack.c.l.b16 %v1503
        %v1514 = vunpack.c.h.b16 %v1503
        %v1515 = vunpack.c.l.b16 %v1504
        %v1516 = vunpack.c.h.b16 %v1504
        %v1517 = vpack.c.b16 %v1511, %v1509
        %v1518 = vpack.c.b16 %v1512, %v1510
        %v1519 = vpack.c.b16 %v1515, %v1513
        %v1520 = vpack.c.b16 %v1516, %v1514
        %1525 = vmatprep.subr.bf16.mxu0 0
        %1526 = vmatpush1.bf16.msra.mxu0 0
        %1527 = vmatprep.subr.bf16.mxu0 0
        %1528 = vmatpush1.bf16.msra.mxu0 0
        %1529 = vmatprep.subr.bf16.mxu0 0
        %1530 = vmatpush1.bf16.msra.mxu0 0
        %1531 = vmatprep.subr.bf16.mxu0 0
        %1532 = vmatpush1.bf16.msra.mxu0 0
        %1533 = vmatprep.subr.bf16.mxu0 0
        %1534 = vmatpush1.bf16.msra.mxu0 0
        %1535 = vmatprep.subr.bf16.mxu0 0
        %1536 = vmatpush1.bf16.msra.mxu0 0
        %1537 = vmatprep.subr.bf16.mxu0 %v1520
        %1538 = vmatpush1.bf16.msra.mxu0 %v1519
        %1539 = vmatprep.subr.bf16.mxu0 %v1518
        %1540 = vmatpush1.bf16.msra.mxu0 %v1517
        %1541 = vmatprep.subr.bf16.mxu0 0
        %1542 = vmatpush2.bf16.msra.mxu0 0
        %1543 = vmatprep.subr.bf16.mxu0 0
        %1544 = vmatpush2.bf16.msra.mxu0 0
        %1545 = vmatprep.subr.bf16.mxu0 0
        %1546 = vmatpush2.bf16.msra.mxu0 0
        %1547 = vmatprep.subr.bf16.mxu0 0
        %1548 = vmatpush2.bf16.msra.mxu0 0
        %1549 = vmatprep.subr.bf16.mxu0 0
        %1550 = vmatpush2.bf16.msra.mxu0 0
        %1551 = vmatprep.subr.bf16.mxu0 0
        %1552 = vmatpush2.bf16.msra.mxu0 0
        %1553 = vmatprep.subr.bf16.mxu0 0
        %1554 = vmatpush2.bf16.msra.mxu0 0
        %1555 = vmatprep.subr.bf16.mxu0 0
        %1556 = vmatpush2.bf16.msra.mxu0 0
        %1557 = vmatprep.mubr.bf16.mxu0 0
        %1558 = vmatmul.mubr.bf16.gmra.mxu0 %v1375
        %v1559 = vpop.f32.mrf.mxu0
        %v1560 = vadd.f32 0.0, %v1559
        %v1561 = vpop.f32.mrf.mxu0
        %v1562 = vadd.f32 0.0, %v1561
        %v1563 = vpop.f32.mrf.mxu0
        %v1564 = vpop.f32.mrf.mxu0
        %1565 = vdwg.mxu0
        %v1570 = vunpack.c.l.b16 %v1497
        %v1571 = vunpack.c.h.b16 %v1497
        %v1572 = vunpack.c.l.b16 %v1498
        %v1573 = vunpack.c.h.b16 %v1498
        %v1574 = vunpack.c.l.b16 %v1499
        %v1575 = vunpack.c.h.b16 %v1499
        %v1576 = vunpack.c.l.b16 %v1500
        %v1577 = vunpack.c.h.b16 %v1500
        %v1578 = vpack.c.b16 %v1572, %v1570
        %v1579 = vpack.c.b16 %v1573, %v1571
        %v1580 = vpack.c.b16 %v1576, %v1574
        %v1581 = vpack.c.b16 %v1577, %v1575
        %1586 = vmatprep.subr.bf16.mxu0 0
        %1587 = vmatpush1.bf16.msra.mxu0 0
        %1588 = vmatprep.subr.bf16.mxu0 0
        %1589 = vmatpush1.bf16.msra.mxu0 0
        %1590 = vmatprep.subr.bf16.mxu0 0
        %1591 = vmatpush1.bf16.msra.mxu0 0
        %1592 = vmatprep.subr.bf16.mxu0 0
        %1593 = vmatpush1.bf16.msra.mxu0 0
        %1594 = vmatprep.subr.bf16.mxu0 0
        %1595 = vmatpush1.bf16.msra.mxu0 0
        %1596 = vmatprep.subr.bf16.mxu0 0
        %1597 = vmatpush1.bf16.msra.mxu0 0
        %1598 = vmatprep.subr.bf16.mxu0 %v1581
        %1599 = vmatpush1.bf16.msra.mxu0 %v1580
        %1600 = vmatprep.subr.bf16.mxu0 %v1579
        %1601 = vmatpush1.bf16.msra.mxu0 %v1578
        %1602 = vmatprep.subr.bf16.mxu0 0
        %1603 = vmatpush2.bf16.msra.mxu0 0
        %1604 = vmatprep.subr.bf16.mxu0 0
        %1605 = vmatpush2.bf16.msra.mxu0 0
        %1606 = vmatprep.subr.bf16.mxu0 0
        %1607 = vmatpush2.bf16.msra.mxu0 0
        %1608 = vmatprep.subr.bf16.mxu0 0
        %1609 = vmatpush2.bf16.msra.mxu0 0
        %1610 = vmatprep.subr.bf16.mxu0 0
        %1611 = vmatpush2.bf16.msra.mxu0 0
        %1612 = vmatprep.subr.bf16.mxu0 0
        %1613 = vmatpush2.bf16.msra.mxu0 0
        %1614 = vmatprep.subr.bf16.mxu0 0
        %1615 = vmatpush2.bf16.msra.mxu0 0
        %1616 = vmatprep.subr.bf16.mxu0 0
        %1617 = vmatpush2.bf16.msra.mxu0 0
        %1618 = vmatprep.mubr.bf16.mxu0 0
        %1619 = vmatmul.mubr.bf16.gmra.mxu0 %v1218
        %v1620 = vpop.f32.mrf.mxu0
        %v1621 = vadd.f32 %v1560, %v1620
        %v1622 = vpop.f32.mrf.mxu0
        %v1623 = vadd.f32 %v1562, %v1622
        %v1624 = vpop.f32.mrf.mxu0
        %v1625 = vpop.f32.mrf.mxu0
        %1626 = vdwg.mxu0
        %v1627 = vld [vmem:[#allocation25] sm:$0x3]
        %v1629 = vlaneseq
        %v1630 = vshrl.u32 %v1629, 7
        %v1631 = vsub.s32 0, %v1630
        %v1632 = vrot.slane %v1627, %v1631
        %v1633 = vlaneseq
        %v1634 = vshrl.u32 %v1633, 7
        %v1635 = vsub.s32 1, %v1634
        %v1636 = vrot.slane %v1627, %v1635
        %v1639 = vadd.f32 %v1621, %v1632
        %v1640 = vadd.f32 %v1623, %v1636
        %v1641 = vmax.f32 %v1639, 0.0
        %v1642 = vmax.f32 %v1640, 0.0
        %v1643 = vpack.c.bf16 %v1641, %v1641
        %v1644 = vpack.c.bf16 %v1642, %v1642
        %v1645 = vld [vmem:[%s17] sm:$0xf]
        %v1646 = vld [vmem:[%s17 + $0x4] sm:$0xf]
        %v1647 = vld [vmem:[%s17 + $0x8] sm:$0xf]
        %v1648 = vld [vmem:[%s17 + $0xc] sm:$0xf]
        %v1649 = vld [vmem:[%s17 + $0x10] sm:$0xf]
        %v1650 = vld [vmem:[%s17 + $0x14] sm:$0xf]
        %v1651 = vld [vmem:[%s17 + $0x18] sm:$0xf]
        %v1652 = vld [vmem:[%s17 + $0x1c] sm:$0xf]
        %v1653 = vld [vmem:[%s17 + $0x20] sm:$0xf]
        %v1654 = vld [vmem:[%s17 + $0x24] sm:$0xf]
        %v1655 = vld [vmem:[%s17 + $0x28] sm:$0xf]
        %v1656 = vld [vmem:[%s17 + $0x2c] sm:$0xf]
        %v1657 = vld [vmem:[%s17 + $0x30] sm:$0xf]
        %v1658 = vld [vmem:[%s17 + $0x34] sm:$0xf]
        %v1659 = vld [vmem:[%s17 + $0x38] sm:$0xf]
        %v1660 = vld [vmem:[%s17 + $0x3c] sm:$0xf]
        %v1661 = vld [vmem:[%s17 + $0x40] sm:$0xf]
        %v1662 = vld [vmem:[%s17 + $0x44] sm:$0xf]
        %v1663 = vld [vmem:[%s17 + $0x48] sm:$0xf]
        %v1664 = vld [vmem:[%s17 + $0x4c] sm:$0xf]
        %v1665 = vld [vmem:[%s17 + $0x50] sm:$0xf]
        %v1666 = vld [vmem:[%s17 + $0x54] sm:$0xf]
        %v1667 = vld [vmem:[%s17 + $0x58] sm:$0xf]
        %v1668 = vld [vmem:[%s17 + $0x5c] sm:$0xf]
        %v1669 = vld [vmem:[%s17 + $0x60] sm:$0xf]
        %v1670 = vld [vmem:[%s17 + $0x64] sm:$0xf]
        %v1671 = vld [vmem:[%s17 + $0x68] sm:$0xf]
        %v1672 = vld [vmem:[%s17 + $0x6c] sm:$0xf]
        %v1673 = vld [vmem:[%s17 + $0x70] sm:$0xf]
        %v1674 = vld [vmem:[%s17 + $0x74] sm:$0xf]
        %v1675 = vld [vmem:[%s17 + $0x78] sm:$0xf]
        %v1676 = vld [vmem:[%s17 + $0x7c] sm:$0xf]
        %v1677 = vld [vmem:[#allocation26] sm:$0x1]
        %v1679 = vlaneseq
        %v1680 = vshrl.u32 %v1679, 7
        %v1681 = vsub.s32 0, %v1680
        %v1682 = vrot.slane %v1677, %v1681
        %v1716 = vunpack.c.l.b16 %v1645
        %v1717 = vunpack.c.l.b16 %v1646
        %v1718 = vunpack.c.l.b16 %v1647
        %v1719 = vunpack.c.l.b16 %v1648
        %v1720 = vunpack.c.l.b16 %v1649
        %v1721 = vunpack.c.l.b16 %v1650
        %v1722 = vunpack.c.l.b16 %v1651
        %v1723 = vunpack.c.l.b16 %v1652
        %v1724 = vunpack.c.l.b16 %v1653
        %v1725 = vunpack.c.l.b16 %v1654
        %v1726 = vunpack.c.l.b16 %v1655
        %v1727 = vunpack.c.l.b16 %v1656
        %v1728 = vunpack.c.l.b16 %v1657
        %v1729 = vunpack.c.l.b16 %v1658
        %v1730 = vunpack.c.l.b16 %v1659
        %v1731 = vunpack.c.l.b16 %v1660
        %v1732 = vunpack.c.l.b16 %v1661
        %v1733 = vunpack.c.l.b16 %v1662
        %v1734 = vunpack.c.l.b16 %v1663
        %v1735 = vunpack.c.l.b16 %v1664
        %v1736 = vunpack.c.l.b16 %v1665
        %v1737 = vunpack.c.l.b16 %v1666
        %v1738 = vunpack.c.l.b16 %v1667
        %v1739 = vunpack.c.l.b16 %v1668
        %v1740 = vunpack.c.l.b16 %v1669
        %v1741 = vunpack.c.l.b16 %v1670
        %v1742 = vunpack.c.l.b16 %v1671
        %v1743 = vunpack.c.l.b16 %v1672
        %v1744 = vunpack.c.l.b16 %v1673
        %v1745 = vunpack.c.l.b16 %v1674
        %v1746 = vunpack.c.l.b16 %v1675
        %v1747 = vunpack.c.l.b16 %v1676
        %v1748 = vpack.c.b16 %v1717, %v1716
        %v1749 = vpack.c.b16 %v1719, %v1718
        %v1750 = vpack.c.b16 %v1721, %v1720
        %v1751 = vpack.c.b16 %v1723, %v1722
        %v1752 = vpack.c.b16 %v1725, %v1724
        %v1753 = vpack.c.b16 %v1727, %v1726
        %v1754 = vpack.c.b16 %v1729, %v1728
        %v1755 = vpack.c.b16 %v1731, %v1730
        %v1756 = vpack.c.b16 %v1733, %v1732
        %v1757 = vpack.c.b16 %v1735, %v1734
        %v1758 = vpack.c.b16 %v1737, %v1736
        %v1759 = vpack.c.b16 %v1739, %v1738
        %v1760 = vpack.c.b16 %v1741, %v1740
        %v1761 = vpack.c.b16 %v1743, %v1742
        %v1762 = vpack.c.b16 %v1745, %v1744
        %v1763 = vpack.c.b16 %v1747, %v1746
        %1780 = vmatprep.subr.bf16.mxu0 0
        %1781 = vmatpush1.bf16.msra.mxu0 %v1755
        %1782 = vmatprep.subr.bf16.mxu0 0
        %1783 = vmatpush1.bf16.msra.mxu0 %v1754
        %1784 = vmatprep.subr.bf16.mxu0 0
        %1785 = vmatpush1.bf16.msra.mxu0 %v1753
        %1786 = vmatprep.subr.bf16.mxu0 0
        %1787 = vmatpush1.bf16.msra.mxu0 %v1752
        %1788 = vmatprep.subr.bf16.mxu0 0
        %1789 = vmatpush1.bf16.msra.mxu0 %v1751
        %1790 = vmatprep.subr.bf16.mxu0 0
        %1791 = vmatpush1.bf16.msra.mxu0 %v1750
        %1792 = vmatprep.subr.bf16.mxu0 0
        %1793 = vmatpush1.bf16.msra.mxu0 %v1749
        %1794 = vmatprep.subr.bf16.mxu0 0
        %1795 = vmatpush1.bf16.msra.mxu0 %v1748
        %1796 = vmatprep.subr.bf16.mxu0 0
        %1797 = vmatpush2.bf16.msra.mxu0 %v1763
        %1798 = vmatprep.subr.bf16.mxu0 0
        %1799 = vmatpush2.bf16.msra.mxu0 %v1762
        %1800 = vmatprep.subr.bf16.mxu0 0
        %1801 = vmatpush2.bf16.msra.mxu0 %v1761
        %1802 = vmatprep.subr.bf16.mxu0 0
        %1803 = vmatpush2.bf16.msra.mxu0 %v1760
        %1804 = vmatprep.subr.bf16.mxu0 0
        %1805 = vmatpush2.bf16.msra.mxu0 %v1759
        %1806 = vmatprep.subr.bf16.mxu0 0
        %1807 = vmatpush2.bf16.msra.mxu0 %v1758
        %1808 = vmatprep.subr.bf16.mxu0 0
        %1809 = vmatpush2.bf16.msra.mxu0 %v1757
        %1810 = vmatprep.subr.bf16.mxu0 0
        %1811 = vmatpush2.bf16.msra.mxu0 %v1756
        %1812 = vmatprep.mubr.bf16.mxu0 %v1496
        %1813 = vmatmul.mubr.bf16.gmra.mxu0 %v1495
        %v1814 = vpop.f32.mrf.mxu0
        %v1815 = vadd.f32 %v1682, %v1814
        %v1816 = vpop.f32.mrf.mxu0
        %v1817 = vpop.f32.mrf.mxu0
        %v1818 = vpop.f32.mrf.mxu0
        %1819 = vdwg.mxu0
        %v1820 = vmax.f32 %v1815, 0.0
        %v1821 = vpack.c.bf16 %v1820, %v1820
        %v1822 = vld [vmem:[%s19] sm:$0xf]
        %v1823 = vld [vmem:[%s19 + $0x4] sm:$0xf]
        %v1824 = vld [vmem:[%s19 + $0x8] sm:$0xf]
        %v1825 = vld [vmem:[%s19 + $0xc] sm:$0xf]
        %v1826 = vld [vmem:[%s19 + $0x10] sm:$0xf]
        %v1827 = vld [vmem:[%s19 + $0x14] sm:$0xf]
        %v1828 = vld [vmem:[%s19 + $0x18] sm:$0xf]
        %v1829 = vld [vmem:[%s19 + $0x1c] sm:$0xf]
        %v1830 = vld [vmem:[%s19 + $0x20] sm:$0xf]
        %v1831 = vld [vmem:[%s19 + $0x24] sm:$0xf]
        %v1832 = vld [vmem:[%s19 + $0x28] sm:$0xf]
        %v1833 = vld [vmem:[%s19 + $0x2c] sm:$0xf]
        %v1834 = vld [vmem:[%s19 + $0x30] sm:$0xf]
        %v1835 = vld [vmem:[%s19 + $0x34] sm:$0xf]
        %v1836 = vld [vmem:[%s19 + $0x38] sm:$0xf]
        %v1837 = vld [vmem:[%s19 + $0x3c] sm:$0xf]
        %v1838 = vld [vmem:[%s20] sm:$0x1]
        %v1840 = vlaneseq
        %v1841 = vshrl.u32 %v1840, 7
        %v1842 = vsub.s32 0, %v1841
        %v1843 = vrot.slane %v1838, %v1842
        %v1861 = vunpack.c.l.b16 %v1822
        %v1862 = vunpack.c.l.b16 %v1823
        %v1863 = vunpack.c.l.b16 %v1824
        %v1864 = vunpack.c.l.b16 %v1825
        %v1865 = vunpack.c.l.b16 %v1826
        %v1866 = vunpack.c.l.b16 %v1827
        %v1867 = vunpack.c.l.b16 %v1828
        %v1868 = vunpack.c.l.b16 %v1829
        %v1869 = vunpack.c.l.b16 %v1830
        %v1870 = vunpack.c.l.b16 %v1831
        %v1871 = vunpack.c.l.b16 %v1832
        %v1872 = vunpack.c.l.b16 %v1833
        %v1873 = vunpack.c.l.b16 %v1834
        %v1874 = vunpack.c.l.b16 %v1835
        %v1875 = vunpack.c.l.b16 %v1836
        %v1876 = vunpack.c.l.b16 %v1837
        %v1877 = vpack.c.b16 %v1862, %v1861
        %v1878 = vpack.c.b16 %v1864, %v1863
        %v1879 = vpack.c.b16 %v1866, %v1865
        %v1880 = vpack.c.b16 %v1868, %v1867
        %v1881 = vpack.c.b16 %v1870, %v1869
        %v1882 = vpack.c.b16 %v1872, %v1871
        %v1883 = vpack.c.b16 %v1874, %v1873
        %v1884 = vpack.c.b16 %v1876, %v1875
        %1893 = vmatprep.subr.bf16.mxu0 0
        %1894 = vmatpush1.bf16.msra.mxu0 %v1884
        %1895 = vmatprep.subr.bf16.mxu0 0
        %1896 = vmatpush1.bf16.msra.mxu0 %v1883
        %1897 = vmatprep.subr.bf16.mxu0 0
        %1898 = vmatpush1.bf16.msra.mxu0 %v1882
        %1899 = vmatprep.subr.bf16.mxu0 0
        %1900 = vmatpush1.bf16.msra.mxu0 %v1881
        %1901 = vmatprep.subr.bf16.mxu0 0
        %1902 = vmatpush1.bf16.msra.mxu0 %v1880
        %1903 = vmatprep.subr.bf16.mxu0 0
        %1904 = vmatpush1.bf16.msra.mxu0 %v1879
        %1905 = vmatprep.subr.bf16.mxu0 0
        %1906 = vmatpush1.bf16.msra.mxu0 %v1878
        %1907 = vmatprep.subr.bf16.mxu0 0
        %1908 = vmatpush1.bf16.msra.mxu0 %v1877
        %1909 = vmatprep.subr.bf16.mxu0 0
        %1910 = vmatpush2.bf16.msra.mxu0 0
        %1911 = vmatprep.subr.bf16.mxu0 0
        %1912 = vmatpush2.bf16.msra.mxu0 0
        %1913 = vmatprep.subr.bf16.mxu0 0
        %1914 = vmatpush2.bf16.msra.mxu0 0
        %1915 = vmatprep.subr.bf16.mxu0 0
        %1916 = vmatpush2.bf16.msra.mxu0 0
        %1917 = vmatprep.subr.bf16.mxu0 0
        %1918 = vmatpush2.bf16.msra.mxu0 0
        %1919 = vmatprep.subr.bf16.mxu0 0
        %1920 = vmatpush2.bf16.msra.mxu0 0
        %1921 = vmatprep.subr.bf16.mxu0 0
        %1922 = vmatpush2.bf16.msra.mxu0 0
        %1923 = vmatprep.subr.bf16.mxu0 0
        %1924 = vmatpush2.bf16.msra.mxu0 0
        %1925 = vmatprep.mubr.bf16.mxu0 0
        %1926 = vmatmul.mubr.bf16.gmra.mxu0 %v1821
        %v1927 = vpop.f32.mrf.mxu0
        %v1928 = vadd.f32 %v1843, %v1927
        %v1929 = vpop.f32.mrf.mxu0
        %v1930 = vpop.f32.mrf.mxu0
        %v1931 = vpop.f32.mrf.mxu0
        %1932 = vdwg.mxu0
        %v1933 = vmax.f32 %v1928, 0.0
        %v1934 = vpack.c.bf16 %v1933, %v1933
        %v1935 = vld [vmem:[#allocation28] sm:$0xf]
        %v1936 = vld [vmem:[#allocation28 + $0x4] sm:$0xf]
        %v1937 = vld [vmem:[#allocation28 + $0x8] sm:$0xf]
        %v1938 = vld [vmem:[#allocation28 + $0xc] sm:$0xf]
        %v1939 = vld [vmem:[#allocation28 + $0x10] sm:$0xf]
        %v1940 = vld [vmem:[#allocation28 + $0x14] sm:$0xf]
        %v1941 = vld [vmem:[#allocation28 + $0x18] sm:$0xf]
        %v1942 = vld [vmem:[#allocation28 + $0x1c] sm:$0xf]
        %v1943 = vld [vmem:[%s22] sm:$0xf]
        %v1944 = vld [vmem:[%s22 + $0x4] sm:$0xf]
        %v1945 = vld [vmem:[%s22 + $0x8] sm:$0xf]
        %v1946 = vld [vmem:[%s22 + $0xc] sm:$0xf]
        %v1947 = vld [vmem:[%s22 + $0x10] sm:$0xf]
        %v1948 = vld [vmem:[%s22 + $0x14] sm:$0xf]
        %v1949 = vld [vmem:[%s22 + $0x18] sm:$0xf]
        %v1950 = vld [vmem:[%s22 + $0x1c] sm:$0xf]
        %v1951 = vld [vmem:[%s22 + $0x20] sm:$0xf]
        %v1952 = vld [vmem:[%s22 + $0x24] sm:$0xf]
        %v1953 = vld [vmem:[%s22 + $0x28] sm:$0xf]
        %v1954 = vld [vmem:[%s22 + $0x2c] sm:$0xf]
        %v1955 = vld [vmem:[%s22 + $0x30] sm:$0xf]
        %v1956 = vld [vmem:[%s22 + $0x34] sm:$0xf]
        %v1957 = vld [vmem:[%s22 + $0x38] sm:$0xf]
        %v1958 = vld [vmem:[%s22 + $0x3c] sm:$0xf]
        %v1959 = vld [vmem:[%s22 + $0x40] sm:$0xf]
        %v1960 = vld [vmem:[%s22 + $0x44] sm:$0xf]
        %v1961 = vld [vmem:[%s22 + $0x48] sm:$0xf]
        %v1962 = vld [vmem:[%s22 + $0x4c] sm:$0xf]
        %v1963 = vld [vmem:[%s22 + $0x50] sm:$0xf]
        %v1964 = vld [vmem:[%s22 + $0x54] sm:$0xf]
        %v1965 = vld [vmem:[%s22 + $0x58] sm:$0xf]
        %v1966 = vld [vmem:[%s22 + $0x5c] sm:$0xf]
        %v1991 = vunpack.c.l.b16 %v1943
        %v1992 = vunpack.c.l.b16 %v1944
        %v1993 = vunpack.c.l.b16 %v1945
        %v1994 = vunpack.c.l.b16 %v1946
        %v1995 = vunpack.c.l.b16 %v1947
        %v1996 = vunpack.c.l.b16 %v1948
        %v1997 = vunpack.c.l.b16 %v1949
        %v1998 = vunpack.c.l.b16 %v1950
        %v1999 = vunpack.c.l.b16 %v1951
        %v2000 = vunpack.c.l.b16 %v1952
        %v2001 = vunpack.c.l.b16 %v1953
        %v2002 = vunpack.c.l.b16 %v1954
        %v2003 = vunpack.c.l.b16 %v1955
        %v2004 = vunpack.c.l.b16 %v1956
        %v2005 = vunpack.c.l.b16 %v1957
        %v2006 = vunpack.c.l.b16 %v1958
        %v2007 = vunpack.c.l.b16 %v1959
        %v2008 = vunpack.c.l.b16 %v1960
        %v2009 = vunpack.c.l.b16 %v1961
        %v2010 = vunpack.c.l.b16 %v1962
        %v2011 = vunpack.c.l.b16 %v1963
        %v2012 = vunpack.c.l.b16 %v1964
        %v2013 = vunpack.c.l.b16 %v1965
        %v2014 = vunpack.c.l.b16 %v1966
        %v2015 = vpack.c.b16 %v1992, %v1991
        %v2016 = vpack.c.b16 %v1994, %v1993
        %v2017 = vpack.c.b16 %v1996, %v1995
        %v2018 = vpack.c.b16 %v1998, %v1997
        %v2019 = vpack.c.b16 %v2000, %v1999
        %v2020 = vpack.c.b16 %v2002, %v2001
        %v2021 = vpack.c.b16 %v2004, %v2003
        %v2022 = vpack.c.b16 %v2006, %v2005
        %v2023 = vpack.c.b16 %v2008, %v2007
        %v2024 = vpack.c.b16 %v2010, %v2009
        %v2025 = vpack.c.b16 %v2012, %v2011
        %v2026 = vpack.c.b16 %v2014, %v2013
        %v2040 = vsel %vm1080, %v1644, 0
        %2042 = vmatprep.subr.bf16.mxu0 0
        %2043 = vmatpush1.bf16.msra.mxu0 %v2022
        %2044 = vmatprep.subr.bf16.mxu0 0
        %2045 = vmatpush1.bf16.msra.mxu0 %v2021
        %2046 = vmatprep.subr.bf16.mxu0 0
        %2047 = vmatpush1.bf16.msra.mxu0 %v2020
        %2048 = vmatprep.subr.bf16.mxu0 0
        %2049 = vmatpush1.bf16.msra.mxu0 %v2019
        %2050 = vmatprep.subr.bf16.mxu0 0
        %2051 = vmatpush1.bf16.msra.mxu0 %v2018
        %2052 = vmatprep.subr.bf16.mxu0 0
        %2053 = vmatpush1.bf16.msra.mxu0 %v2017
        %2054 = vmatprep.subr.bf16.mxu0 0
        %2055 = vmatpush1.bf16.msra.mxu0 %v2016
        %2056 = vmatprep.subr.bf16.mxu0 0
        %2057 = vmatpush1.bf16.msra.mxu0 %v2015
        %2058 = vmatprep.subr.bf16.mxu0 0
        %2059 = vmatpush2.bf16.msra.mxu0 0
        %2060 = vmatprep.subr.bf16.mxu0 0
        %2061 = vmatpush2.bf16.msra.mxu0 0
        %2062 = vmatprep.subr.bf16.mxu0 0
        %2063 = vmatpush2.bf16.msra.mxu0 0
        %2064 = vmatprep.subr.bf16.mxu0 0
        %2065 = vmatpush2.bf16.msra.mxu0 0
        %2066 = vmatprep.subr.bf16.mxu0 0
        %2067 = vmatpush2.bf16.msra.mxu0 %v2026
        %2068 = vmatprep.subr.bf16.mxu0 0
        %2069 = vmatpush2.bf16.msra.mxu0 %v2025
        %2070 = vmatprep.subr.bf16.mxu0 0
        %2071 = vmatpush2.bf16.msra.mxu0 %v2024
        %2072 = vmatprep.subr.bf16.mxu0 0
        %2073 = vmatpush2.bf16.msra.mxu0 %v2023
        %2074 = vmatprep.mubr.bf16.mxu0 %v2040
        %2075 = vmatmul.mubr.bf16.gmra.mxu0 %v1643
        %v2076 = vpop.f32.mrf.mxu0
        %v2077 = vadd.f32 0.0, %v2076
        %v2078 = vpop.f32.mrf.mxu0
        %v2079 = vpop.f32.mrf.mxu0
        %v2080 = vpop.f32.mrf.mxu0
        %2081 = vdwg.mxu0
        %v2090 = vunpack.c.l.b16 %v1935
        %v2091 = vunpack.c.l.b16 %v1936
        %v2092 = vunpack.c.l.b16 %v1937
        %v2093 = vunpack.c.l.b16 %v1938
        %v2094 = vunpack.c.l.b16 %v1939
        %v2095 = vunpack.c.l.b16 %v1940
        %v2096 = vunpack.c.l.b16 %v1941
        %v2097 = vunpack.c.l.b16 %v1942
        %v2098 = vpack.c.b16 %v2091, %v2090
        %v2099 = vpack.c.b16 %v2093, %v2092
        %v2100 = vpack.c.b16 %v2095, %v2094
        %v2101 = vpack.c.b16 %v2097, %v2096
        %v2107 = vsel %vm1080, %v1934, 0
        %2109 = vmatprep.subr.bf16.mxu0 0
        %2110 = vmatpush1.bf16.msra.mxu0 0
        %2111 = vmatprep.subr.bf16.mxu0 0
        %2112 = vmatpush1.bf16.msra.mxu0 0
        %2113 = vmatprep.subr.bf16.mxu0 0
        %2114 = vmatpush1.bf16.msra.mxu0 0
        %2115 = vmatprep.subr.bf16.mxu0 0
        %2116 = vmatpush1.bf16.msra.mxu0 0
        %2117 = vmatprep.subr.bf16.mxu0 0
        %2118 = vmatpush1.bf16.msra.mxu0 %v2101
        %2119 = vmatprep.subr.bf16.mxu0 0
        %2120 = vmatpush1.bf16.msra.mxu0 %v2100
        %2121 = vmatprep.subr.bf16.mxu0 0
        %2122 = vmatpush1.bf16.msra.mxu0 %v2099
        %2123 = vmatprep.subr.bf16.mxu0 0
        %2124 = vmatpush1.bf16.msra.mxu0 %v2098
        %2125 = vmatprep.subr.bf16.mxu0 0
        %2126 = vmatpush2.bf16.msra.mxu0 0
        %2127 = vmatprep.subr.bf16.mxu0 0
        %2128 = vmatpush2.bf16.msra.mxu0 0
        %2129 = vmatprep.subr.bf16.mxu0 0
        %2130 = vmatpush2.bf16.msra.mxu0 0
        %2131 = vmatprep.subr.bf16.mxu0 0
        %2132 = vmatpush2.bf16.msra.mxu0 0
        %2133 = vmatprep.subr.bf16.mxu0 0
        %2134 = vmatpush2.bf16.msra.mxu0 0
        %2135 = vmatprep.subr.bf16.mxu0 0
        %2136 = vmatpush2.bf16.msra.mxu0 0
        %2137 = vmatprep.subr.bf16.mxu0 0
        %2138 = vmatpush2.bf16.msra.mxu0 0
        %2139 = vmatprep.subr.bf16.mxu0 0
        %2140 = vmatpush2.bf16.msra.mxu0 0
        %2141 = vmatprep.mubr.bf16.mxu0 0
        %2142 = vmatmul.mubr.bf16.gmra.mxu0 %v2107
        %v2143 = vpop.f32.mrf.mxu0
        %v2144 = vadd.f32 %v2077, %v2143
        %v2145 = vpop.f32.mrf.mxu0
        %v2146 = vpop.f32.mrf.mxu0
        %v2147 = vpop.f32.mrf.mxu0
        %2148 = vdwg.mxu0
        %v2149 = vld [vmem:[%s23] sm:$0x1]
        %v2151 = vlaneseq
        %v2152 = vshrl.u32 %v2151, 7
        %v2153 = vsub.s32 0, %v2152
        %v2154 = vrot.slane %v2149, %v2153
        %v2156 = vadd.f32 %v2144, %v2154
        %v2157 = vlaneseq
        %v2158 = vand.u32 %v2157, 127
        %vm2159 = vcmp.eq.s32.totalorder %v2158, 0
        %vm2160 = vcmp.eq.s32.totalorder %v2158, 1
        %vm2161 = vmor %vm2159, %vm2160
        %vm2162 = vcmp.eq.s32.totalorder %v2158, 3
        %vm2163 = vmor %vm2161, %vm2162
        %vm2164 = vcmp.eq.s32.totalorder %v2158, 2
        %vm2165 = vcmp.ge.s32.totalorder %v2158, 4
        %vm2166 = vcmp.lt.s32.totalorder %v2158, 9
        %vm2167 = vmand %vm2165, %vm2166
        %v2168 = vsel %vm2167, %v2156, -1e+30
        %2169 = vmax.xlane.f32.xlu0 %v2168
        %v2170 = vpop.xlane.xlu0 %2169
        %v2171 = vsub.f32 %v2168, %v2170
        %v2172 = vmul.f32 %v2171, 1.442695
        %v2173 = vpow.pop %v2172
        %v2174 = vsel %vm2167, %v2173, 0.0
        %2175 = vadd.xlane.f32.xlu0 %v2174
        %v2176 = vpop.xlane.xlu0 %2175
        %v2177 = vrcp.pop %v2176
        %v2178 = vmul.f32 %v2174, %v2177
        %v2179 = vxor.u32 %v2156, 2147483648
        %v2180 = vmul.f32 %v2179, 1.442695
        %v2181 = vpow.pop %v2180
        %v2182 = vadd.f32 %v2181, 1.0
        %v2183 = vrcp.pop %v2182
        %v2184 = vmul.f32 1.0, %v2183
        %v2185 = vtanh.pop %v2156
        %v2186 = vsel %vm2164, %v2185, %v2178
        %v2187 = vsel %vm2163, %v2184, %v2186
        %2188 = vst [vmem:[%s968] sm:$0xff] %v2187
        %s2189 = sand.u32 %s566, 1
        %s2190 = scalar_lea.sflag [#allocation4], %s2189
        %s2191 = sand.u32 %s566, 1
        %s2192 = smul.addr %s2191, 8
        %s2193 = scalar_lea.vmem [#allocation29], %s2192
        // Predicated region
        $region185: #{tpu_custom_call.1} parent=115 // pred_check
          %p2194 = pneg %p576
        $region186: #{tpu_custom_call.1} parent=115 // pred_check_branch
          %2196 = sbr.rel (%p2194) target = $region188
        $region187: #{tpu_custom_call.1} parent=115 // pred_region
          %s2198 = ssub.s32 128, 128
          %2199 = vsyncadd %s2190, %s2198
          %s2200 = smul.addr %s49, 128
          %s2201 = scalar_lea.hbm %s24, %s2200
          %s2203 = sshll.u32 %s2193, 4
          %s2204 = int_to_ptr.vmem [resolvable:$true] %s2203
          %2206 = dma.vmem_to_hbm [thread:$0]  %s2204, 128, %s2201, %s2190
        $region188: #{tpu_custom_call.1} parent=115 // pred_fallthru
          _
      $region116: #{tpu_custom_call.1} parent=5 // pred_fallthru
        _
      %p2207 = scmp.le.s32.totalorder 2, %s44
      // Predicated region
      $region189: #{tpu_custom_call.1} parent=5 // pred_check
        %p2208 = pneg %p2207
      $region190: #{tpu_custom_call.1} parent=5 // pred_check_branch
        %2210 = sbr.rel (%p2208) target = $region192
      $region191: #{tpu_custom_call.1} parent=5 // pred_region
        %s2211 = ssub.s32 %s44, 2
        // Predicated region
        $region193: #{tpu_custom_call.1} parent=191 // pred_check
          %p2212 = pneg %p582
        $region194: #{tpu_custom_call.1} parent=191 // pred_check_branch
          %2214 = sbr.rel (%p2212) target = $region196
        $region195: #{tpu_custom_call.1} parent=191 // pred_region
          %s2215 = sand.u32 %s567, 1
          %s2216 = scalar_lea.sflag [#allocation4], %s2215
          %s2217 = sand.u32 %s567, 1
          %s2218 = smul.addr %s2217, 8
          %s2219 = scalar_lea.vmem [#allocation29], %s2218
          %2220 = dma.done %s2216, 128
        $region196: #{tpu_custom_call.1} parent=191 // pred_fallthru
          _
      $region192: #{tpu_custom_call.1} parent=5 // pred_fallthru
        _
    $region6: #{tpu_custom_call.1} parent=1 // loop_footer
      %s48 = sadd.s32 1, %s44
    $region7: #{tpu_custom_call.1} parent=1 // loop_footer_branch
      %43 = sbr.rel target = $region3
    $region8: #{tpu_custom_call.1} parent=1 // loop_exit
      _
    %2221 = vsyncpa [#allocation3], 1
    %s2222 = scalar_lea.sflag [#allocation3], 1
    %2223 = vsyncpa %s2222, 1
    %2224 = vsyncpa [#allocation6], 1
    %2225 = vsyncpa [#allocation9], 1
    %2226 = vsyncpa [#allocation12], 1
    %2227 = vsyncpa [#allocation15], 1
    %2228 = vsyncpa [#allocation18], 1
    %2229 = vsyncpa [#allocation21], 1
    %2230 = vsyncpa [#allocation24], 1
    %2231 = vsyncpa [#allocation27], 1
    %2232 = vsyncpa [#allocation4], 1
    %s2233 = scalar_lea.sflag [#allocation4], 1
    %2234 = vsyncpa %s2233, 1

</llo_original>
